<compile_context>
chip_gen: v7x
topology: tpu7x:2x2x1
jax: 0.10.0
libtpu: 0.0.40
codegen_flags: <defaults>
</compile_context>

<pallas_src>
import jax
import jax.numpy as jnp
from jax import lax
from jax.experimental import pallas as pl
from jax.experimental.pallas import tpu as pltpu


# ----------------------------------------------------------------------------
# LSTM layer kernel: grid = (2 streams,), whole time loop inside the kernel.
# Block shapes use `None` for the stream axis so the kernel sees per-stream refs.
# ----------------------------------------------------------------------------
def _lstm_layer_kernel(x_ref, wih_ref, whh_ref, b_ref, h0_ref, c0_ref,
                       y_ref, hn_ref, cn_ref, xw_scr):
    # x_ref:   (T, B, E)      wih_ref: (E, 4H)    whh_ref: (H, 4H)
    # b_ref:   (1, 4H)        h0/c0:   (B, H)
    # y_ref:   (T, B, H)      hn/cn:   (B, H)     xw_scr: (T, B, 4H) VMEM
    T, B, E = x_ref.shape
    H = h0_ref.shape[-1]

    # Time-parallel input projection, hoisted out of the recurrence:
    # one (T*B, E) @ (E, 4H) MXU matmul (+ bias) for all timesteps.
    x_all = x_ref[...].reshape(T * B, E)
    xw = jnp.dot(x_all, wih_ref[...], preferred_element_type=jnp.float32) + b_ref[...]
    xw_scr[...] = xw.reshape(T, B, 4 * H)

    w_hh = whh_ref[...]                          # loaded once, loop-invariant

    def step(t, carry):
        h, c = carry
        gates = xw_scr[t] + jnp.dot(h, w_hh, preferred_element_type=jnp.float32)
        i_g = jax.nn.sigmoid(gates[:, 0 * H:1 * H])
        f_g = jax.nn.sigmoid(gates[:, 1 * H:2 * H])
        g_g = jnp.tanh(gates[:, 2 * H:3 * H])
        o_g = jax.nn.sigmoid(gates[:, 3 * H:4 * H])
        c_new = f_g * c + i_g * g_g
        h_new = o_g * jnp.tanh(c_new)
        y_ref[t] = h_new
        return (h_new, c_new)

    h_fin, c_fin = lax.fori_loop(0, T, step, (h0_ref[...], c0_ref[...]),
                                 unroll=True)
    hn_ref[...] = h_fin                          # written once, after the loop
    cn_ref[...] = c_fin


def lstm_layer_2streams(x, w_ih, w_hh, b, h0, c0):
    """x: (2, T, B, E_in); weights stacked per stream and pre-transposed."""
    S, T, B, E = x.shape
    H = h0.shape[-1]
    return pl.pallas_call(
        _lstm_layer_kernel,
        out_shape=(jax.ShapeDtypeStruct((S, T, B, H), jnp.float32),
                   jax.ShapeDtypeStruct((S, B, H), jnp.float32),
                   jax.ShapeDtypeStruct((S, B, H), jnp.float32)),
        grid=(S,),
        in_specs=[
            pl.BlockSpec((None, T, B, E), lambda s: (s, 0, 0, 0)),
            pl.BlockSpec((None, E, 4 * H), lambda s: (s, 0, 0)),
            pl.BlockSpec((None, H, 4 * H), lambda s: (s, 0, 0)),
            pl.BlockSpec((None, 1, 4 * H), lambda s: (s, 0, 0)),
            pl.BlockSpec((None, B, H), lambda s: (s, 0, 0)),
            pl.BlockSpec((None, B, H), lambda s: (s, 0, 0)),
        ],
        out_specs=(
            pl.BlockSpec((None, T, B, H), lambda s: (s, 0, 0, 0)),
            pl.BlockSpec((None, B, H), lambda s: (s, 0, 0)),
            pl.BlockSpec((None, B, H), lambda s: (s, 0, 0)),
        ),
        scratch_shapes=[pltpu.VMEM((T, B, 4 * H), jnp.float32)],
        compiler_params=pltpu.CompilerParams(
            dimension_semantics=("parallel",)),      # streams independent -> 2 TCs on v7x
    )(x, w_ih, w_hh, b, h0, c0)


# ----------------------------------------------------------------------------
# Head kernel (single invocation, whole slab): red1 + reversed(red2) -> decoder
# -> softmax.  out2 is time-reversed in the wrapper (a free slice) because the
# linear reducer commutes with time reversal.
# ----------------------------------------------------------------------------
def _head_kernel(o1_ref, o2_ref, wr1_ref, br1_ref, wr2_ref, br2_ref,
                 wd_ref, bd_ref, out_ref):
    T, B, H = o1_ref.shape
    o1 = o1_ref[...].reshape(T * B, H)
    o2 = o2_ref[...].reshape(T * B, H)
    red = (jnp.dot(o1, wr1_ref[...], preferred_element_type=jnp.float32) + br1_ref[...]
           + jnp.dot(o2, wr2_ref[...], preferred_element_type=jnp.float32) + br2_ref[...])
    logits = jnp.dot(red, wd_ref[...], preferred_element_type=jnp.float32) + bd_ref[...]
    m = jnp.max(logits, axis=-1, keepdims=True)
    e = jnp.exp(logits - m)
    probs = e / jnp.sum(e, axis=-1, keepdims=True)
    out_ref[...] = probs.reshape(T, B, -1)


def head(out1, out2_rev, wr1, br1, wr2, br2, wd, bd):
    T, B, H = out1.shape
    C = wd.shape[-1]
    return pl.pallas_call(
        _head_kernel,
        out_shape=jax.ShapeDtypeStruct((T, B, C), jnp.float32),
    )(out1, out2_rev, wr1, br1, wr2, br2, wd, bd)


# ----------------------------------------------------------------------------
# Parameter init (deterministic, synthetic).  Weights are stored PRE-TRANSPOSED
# and stacked across the two streams so the kernels never transpose.
# ----------------------------------------------------------------------------
def init_params(key, ntoken, emsize, nunits, nreduced, nlayers):
    p = {}

    def unif(k, shape, scale=0.1):
        return jax.random.uniform(k, shape, jnp.float32, -scale, scale)

    keys = iter(jax.random.split(key, 256))
    emb = unif(next(keys), (ntoken, emsize))
    emb = emb.at[0].set(0.0)                     # padding_idx=0 row zeroed
    p["embedding"] = emb

    for l in range(nlayers):
        in_dim = emsize if l == 0 else nunits
        w_ih = jnp.stack([unif(next(keys), (in_dim, 4 * nunits)) for _ in range(2)])
        w_hh = jnp.stack([unif(next(keys), (nunits, 4 * nunits)) for _ in range(2)])
        b = jnp.stack([(unif(next(keys), (4 * nunits,))
                        + unif(next(keys), (4 * nunits,))).reshape(1, 4 * nunits)
                       for _ in range(2)])
        p[f"w_ih_l{l}"] = w_ih                   # (2, in_dim, 4H)
        p[f"w_hh_l{l}"] = w_hh                   # (2, H, 4H)
        p[f"b_l{l}"] = b                         # (2, 1, 4H)

    p["reducer1_w"] = unif(next(keys), (nunits, nreduced))   # (H, R)
    p["reducer1_b"] = unif(next(keys), (1, nreduced))
    p["reducer2_w"] = unif(next(keys), (nunits, nreduced))
    p["reducer2_b"] = unif(next(keys), (1, nreduced))
    p["decoder_w"] = unif(next(keys), (nreduced, 3))         # (R, 3)
    p["decoder_b"] = jnp.zeros((1, 3), jnp.float32)
    return p


# ----------------------------------------------------------------------------
# Full forward pass (dropout == identity / eval mode).
# ----------------------------------------------------------------------------
def bi_lstm_forward(params, inp, hidden1, hidden2, nlayers):
    emb_table = params["embedding"]
    emb1 = emb_table[inp]                        # (T, B, E)
    emb2 = emb_table[inp[::-1]]                  # reverse_input(inp, 0) then embed
    x = jnp.stack([emb1, emb2])                  # (2, T, B, E), stream-stacked

    hn1, cn1, hn2, cn2 = [], [], [], []
    for l in range(nlayers):
        h0_l = jnp.stack([hidden1[0][l], hidden2[0][l]])   # (2, B, H)
        c0_l = jnp.stack([hidden1[1][l], hidden2[1][l]])
        y, h_l, c_l = lstm_layer_2streams(
            x, params[f"w_ih_l{l}"], params[f"w_hh_l{l}"], params[f"b_l{l}"],
            h0_l, c0_l)
        x = y                                    # inter-layer dropout == identity
        hn1.append(h_l[0]); cn1.append(c_l[0])
        hn2.append(h_l[1]); cn2.append(c_l[1])

    out1 = x[0]
    out2_rev = x[1][::-1]                        # reverse stream-2 once, in JAX
    result = head(out1, out2_rev,
                  params["reducer1_w"], params["reducer1_b"],
                  params["reducer2_w"], params["reducer2_b"],
                  params["decoder_w"], params["decoder_b"])
    hidden1_n = (jnp.stack(hn1), jnp.stack(cn1))
    hidden2_n = (jnp.stack(hn2), jnp.stack(cn2))
    return result, hidden1_n, hidden2_n


# ----------------------------------------------------------------------------
# Pure-JAX reference (same parameter layout) for correctness checking.
# ----------------------------------------------------------------------------
def _lstm_layer_ref(x, w_ih, w_hh, b, h0, c0):
    H = h0.shape[-1]

    def step(carry, x_t):
        h, c = carry
        gates = x_t @ w_ih + h @ w_hh + b
        i = jax.nn.sigmoid(gates[:, 0 * H:1 * H])
        f = jax.nn.sigmoid(gates[:, 1 * H:2 * H])
        g = jnp.tanh(gates[:, 2 * H:3 * H])
        o = jax.nn.sigmoid(gates[:, 3 * H:4 * H])
        c = f * c + i * g
        h = o * jnp.tanh(c)
        return (h, c), h

    (hn, cn), ys = lax.scan(step, (h0, c0), x)
    return ys, hn, cn


def forward_ref(params, inp, hidden1, hidden2, nlayers):
    emb = params["embedding"]
    x1, x2 = emb[inp], emb[inp[::-1]]
    hn1, cn1, hn2, cn2 = [], [], [], []
    for l in range(nlayers):
        y1, h1, c1 = _lstm_layer_ref(x1, params[f"w_ih_l{l}"][0],
                                     params[f"w_hh_l{l}"][0], params[f"b_l{l}"][0],
                                     hidden1[0][l], hidden1[1][l])
        y2, h2, c2 = _lstm_layer_ref(x2, params[f"w_ih_l{l}"][1],
                                     params[f"w_hh_l{l}"][1], params[f"b_l{l}"][1],
                                     hidden2[0][l], hidden2[1][l])
        x1, x2 = y1, y2
        hn1.append(h1); cn1.append(c1); hn2.append(h2); cn2.append(c2)
    red = (x1 @ params["reducer1_w"] + params["reducer1_b"]
           + (x2 @ params["reducer2_w"] + params["reducer2_b"])[::-1])
    logits = red @ params["decoder_w"] + params["decoder_b"]
    result = jax.nn.softmax(logits, axis=-1)
    return result, (jnp.stack(hn1), jnp.stack(cn1)), (jnp.stack(hn2), jnp.stack(cn2))


# ----------------------------------------------------------------------------
if __name__ == "__main__":
    ntoken, emsize, nunits, nreduced, nlayers = 20, 32, 32, 16, 2
    T, B = 8, 2

    key = jax.random.PRNGKey(0)
    k_par, k_inp = jax.random.split(key)
    params = init_params(k_par, ntoken, emsize, nunits, nreduced, nlayers)

    inp = jax.random.randint(k_inp, (T, B), 0, ntoken, dtype=jnp.int32)
    zeros = jnp.zeros((nlayers, B, nunits), jnp.float32)
    hidden1 = (zeros, zeros)                     # init_hidden(bsz)
    hidden2 = (zeros, zeros)

    fwd = jax.jit(bi_lstm_forward, static_argnums=(4,))
    result, h1_n, h2_n = fwd(params, inp, hidden1, hidden2, nlayers)
    result = jax.block_until_ready(result)
    jax.block_until_ready(h1_n)
    jax.block_until_ready(h2_n)

    # Sanity: shapes, softmax rows sum to 1, match pure-JAX reference.
    assert result.shape == (T, B, 3)
    assert h1_n[0].shape == (nlayers, B, nunits)
    assert jnp.allclose(result.sum(-1), 1.0, atol=1e-3)

    res_ref, h1_ref, h2_ref = forward_ref(params, inp, hidden1, hidden2, nlayers)
    assert jnp.allclose(result, res_ref, atol=2e-3, rtol=2e-3)
    assert jnp.allclose(h1_n[0], h1_ref[0], atol=2e-3, rtol=2e-3)
    assert jnp.allclose(h1_n[1], h1_ref[1], atol=2e-3, rtol=2e-3)
    assert jnp.allclose(h2_n[0], h2_ref[0], atol=2e-3, rtol=2e-3)
    assert jnp.allclose(h2_n[1], h2_ref[1], atol=2e-3, rtol=2e-3)

    print("KERNEL_OK")
</pallas_src>

<mosaic_0001>
module attributes {stable_mosaic.version = 11 : i64} {
  func.func @_lstm_layer_kernel(%arg0: i32, %arg1: memref<1x8x2x32xf32, #tpu.memory_space<vmem>>, %arg2: memref<1x32x128xf32, #tpu.memory_space<vmem>>, %arg3: memref<1x32x128xf32, #tpu.memory_space<vmem>>, %arg4: memref<1x1x128xf32, #tpu.memory_space<vmem>>, %arg5: memref<1x2x32xf32, #tpu.memory_space<vmem>>, %arg6: memref<1x2x32xf32, #tpu.memory_space<vmem>>, %arg7: memref<1x8x2x32xf32, #tpu.memory_space<vmem>>, %arg8: memref<1x2x32xf32, #tpu.memory_space<vmem>>, %arg9: memref<1x2x32xf32, #tpu.memory_space<vmem>>, %arg10: memref<8x2x128xf32, #tpu.memory_space<vmem>>) attributes {dimension_semantics = [#tpu.dimension_semantics<parallel>], iteration_bounds = array<i64: 2>, scalar_prefetch = 0 : i64, scratch_operands = 1 : i64, tpu.core_type = #tpu.core_type<tc>, window_params = [{transform_indices = @transform_0, window_bounds = array<i64: 1, 8, 2, 32>}, {transform_indices = @transform_1, window_bounds = array<i64: 1, 32, 128>}, {transform_indices = @transform_2, window_bounds = array<i64: 1, 32, 128>}, {transform_indices = @transform_3, window_bounds = array<i64: 1, 1, 128>}, {transform_indices = @transform_4, window_bounds = array<i64: 1, 2, 32>}, {transform_indices = @transform_5, window_bounds = array<i64: 1, 2, 32>}, {transform_indices = @transform_6, window_bounds = array<i64: 1, 8, 2, 32>}, {transform_indices = @transform_7, window_bounds = array<i64: 1, 2, 32>}, {transform_indices = @transform_8, window_bounds = array<i64: 1, 2, 32>}]} {
    %c0 = arith.constant 0 : index
    %c0_0 = arith.constant 0 : index
    %c0_1 = arith.constant 0 : index
    %c0_2 = arith.constant 0 : index
    %0 = vector.load %arg1[%c0, %c0_0, %c0_1, %c0_2] : memref<1x8x2x32xf32, #tpu.memory_space<vmem>>, vector<1x8x2x32xf32>
    %1 = vector.shape_cast %0 : vector<1x8x2x32xf32> to vector<8x2x32xf32>
    %2 = vector.shape_cast %1 : vector<8x2x32xf32> to vector<16x32xf32>
    %c0_3 = arith.constant 0 : index
    %c0_4 = arith.constant 0 : index
    %c0_5 = arith.constant 0 : index
    %3 = vector.load %arg2[%c0_3, %c0_4, %c0_5] : memref<1x32x128xf32, #tpu.memory_space<vmem>>, vector<1x32x128xf32>
    %4 = vector.shape_cast %3 : vector<1x32x128xf32> to vector<32x128xf32>
    %cst = arith.constant dense<0.000000e+00> : vector<16x128xf32>
    %5 = tpu.matmul %2, %4, %cst {dimension_numbers = #tpu.dot_dimension_numbers<[1], [0], [0], [1], [0, 0, 1, 1], [], []>} : vector<16x32xf32>, vector<32x128xf32>, vector<16x128xf32> -> vector<16x128xf32>
    %c0_6 = arith.constant 0 : index
    %c0_7 = arith.constant 0 : index
    %c0_8 = arith.constant 0 : index
    %6 = vector.load %arg4[%c0_6, %c0_7, %c0_8] : memref<1x1x128xf32, #tpu.memory_space<vmem>>, vector<1x1x128xf32>
    %7 = vector.shape_cast %6 : vector<1x1x128xf32> to vector<1x128xf32>
    %8 = vector.broadcast %7 : vector<1x128xf32> to vector<16x128xf32>
    %9 = arith.addf %5, %8 : vector<16x128xf32>
    %10 = vector.shape_cast %9 : vector<16x128xf32> to vector<8x2x128xf32>
    %c0_9 = arith.constant 0 : index
    %c0_10 = arith.constant 0 : index
    %c0_11 = arith.constant 0 : index
    %11 = vector.load %arg10[%c0_9, %c0_10, %c0_11] : memref<8x2x128xf32, #tpu.memory_space<vmem>>, vector<8x2x128xf32>
    tpu.vector_store %arg10[%c0_9, %c0_10, %c0_11], %10 {strides = array<i32>} : memref<8x2x128xf32, #tpu.memory_space<vmem>>, vector<8x2x128xf32>,
    %c0_12 = arith.constant 0 : index
    %c0_13 = arith.constant 0 : index
    %c0_14 = arith.constant 0 : index
    %12 = vector.load %arg3[%c0_12, %c0_13, %c0_14] : memref<1x32x128xf32, #tpu.memory_space<vmem>>, vector<1x32x128xf32>
    %13 = vector.shape_cast %12 : vector<1x32x128xf32> to vector<32x128xf32>
    %c0_15 = arith.constant 0 : index
    %c0_16 = arith.constant 0 : index
    %c0_17 = arith.constant 0 : index
    %14 = vector.load %arg5[%c0_15, %c0_16, %c0_17] : memref<1x2x32xf32, #tpu.memory_space<vmem>>, vector<1x2x32xf32>
    %15 = vector.shape_cast %14 : vector<1x2x32xf32> to vector<2x32xf32>
    %c0_18 = arith.constant 0 : index
    %c0_19 = arith.constant 0 : index
    %c0_20 = arith.constant 0 : index
    %16 = vector.load %arg6[%c0_18, %c0_19, %c0_20] : memref<1x2x32xf32, #tpu.memory_space<vmem>>, vector<1x2x32xf32>
    %17 = vector.shape_cast %16 : vector<1x2x32xf32> to vector<2x32xf32>
    %c0_i32 = arith.constant 0 : i32
    %18 = arith.index_cast %c0_i32 : i32 to index
    %c0_21 = arith.constant 0 : index
    %c0_22 = arith.constant 0 : index
    %19 = vector.load %arg10[%18, %c0_21, %c0_22] : memref<8x2x128xf32, #tpu.memory_space<vmem>>, vector<1x2x128xf32>
    %20 = vector.shape_cast %19 : vector<1x2x128xf32> to vector<2x128xf32>
    %cst_23 = arith.constant dense<0.000000e+00> : vector<2x128xf32>
    %21 = tpu.matmul %15, %13, %cst_23 {dimension_numbers = #tpu.dot_dimension_numbers<[1], [0], [0], [1], [0, 0, 1, 1], [], []>} : vector<2x32xf32>, vector<32x128xf32>, vector<2x128xf32> -> vector<2x128xf32>
    %22 = arith.addf %20, %21 : vector<2x128xf32>
    %23 = vector.extract_strided_slice %22 {offsets = [0, 0], sizes = [2, 32], strides = [1, 1]} : vector<2x128xf32> to vector<2x32xf32>
    %24 = arith.negf %23 : vector<2x32xf32>
    %25 = math.exp %24 : vector<2x32xf32>
    %cst_24 = arith.constant 1.000000e+00 : f32
    %26 = vector.broadcast %cst_24 : f32 to vector<2x32xf32>
    %27 = arith.addf %26, %25 : vector<2x32xf32>
    %28 = arith.divf %26, %27 : vector<2x32xf32>
    %29 = vector.extract_strided_slice %22 {offsets = [0, 32], sizes = [2, 32], strides = [1, 1]} : vector<2x128xf32> to vector<2x32xf32>
    %30 = arith.negf %29 : vector<2x32xf32>
    %31 = math.exp %30 : vector<2x32xf32>
    %cst_25 = arith.constant 1.000000e+00 : f32
    %32 = vector.broadcast %cst_25 : f32 to vector<2x32xf32>
    %33 = arith.addf %32, %31 : vector<2x32xf32>
    %34 = arith.divf %32, %33 : vector<2x32xf32>
    %35 = vector.extract_strided_slice %22 {offsets = [0, 64], sizes = [2, 32], strides = [1, 1]} : vector<2x128xf32> to vector<2x32xf32>
    %36 = math.tanh %35 : vector<2x32xf32>
    %37 = vector.extract_strided_slice %22 {offsets = [0, 96], sizes = [2, 32], strides = [1, 1]} : vector<2x128xf32> to vector<2x32xf32>
    %38 = arith.negf %37 : vector<2x32xf32>
    %39 = math.exp %38 : vector<2x32xf32>
    %cst_26 = arith.constant 1.000000e+00 : f32
    %40 = vector.broadcast %cst_26 : f32 to vector<2x32xf32>
    %41 = arith.addf %40, %39 : vector<2x32xf32>
    %42 = arith.divf %40, %41 : vector<2x32xf32>
    %43 = arith.mulf %34, %17 : vector<2x32xf32>
    %44 = arith.mulf %28, %36 : vector<2x32xf32>
    %45 = arith.addf %43, %44 : vector<2x32xf32>
    %46 = math.tanh %45 : vector<2x32xf32>
    %47 = arith.mulf %42, %46 : vector<2x32xf32>
    %c0_27 = arith.constant 0 : index
    %48 = arith.index_cast %c0_i32 : i32 to index
    %c0_28 = arith.constant 0 : index
    %c0_29 = arith.constant 0 : index
    %49 = vector.load %arg7[%c0_27, %48, %c0_28, %c0_29] : memref<1x8x2x32xf32, #tpu.memory_space<vmem>>, vector<1x1x2x32xf32>
    %50 = vector.shape_cast %49 : vector<1x1x2x32xf32> to vector<2x32xf32>
    %51 = vector.shape_cast %47 : vector<2x32xf32> to vector<1x1x2x32xf32>
    tpu.vector_store %arg7[%c0_27, %48, %c0_28, %c0_29], %51 {strides = array<i32>} : memref<1x8x2x32xf32, #tpu.memory_space<vmem>>, vector<1x1x2x32xf32>,
    %c1_i32 = arith.constant 1 : i32
    %52 = arith.index_cast %c1_i32 : i32 to index
    %c0_30 = arith.constant 0 : index
    %c0_31 = arith.constant 0 : index
    %53 = vector.load %arg10[%52, %c0_30, %c0_31] : memref<8x2x128xf32, #tpu.memory_space<vmem>>, vector<1x2x128xf32>
    %54 = vector.shape_cast %53 : vector<1x2x128xf32> to vector<2x128xf32>
    %cst_32 = arith.constant dense<0.000000e+00> : vector<2x128xf32>
    %55 = tpu.matmul %47, %13, %cst_32 {dimension_numbers = #tpu.dot_dimension_numbers<[1], [0], [0], [1], [0, 0, 1, 1], [], []>} : vector<2x32xf32>, vector<32x128xf32>, vector<2x128xf32> -> vector<2x128xf32>
    %56 = arith.addf %54, %55 : vector<2x128xf32>
    %57 = vector.extract_strided_slice %56 {offsets = [0, 0], sizes = [2, 32], strides = [1, 1]} : vector<2x128xf32> to vector<2x32xf32>
    %58 = arith.negf %57 : vector<2x32xf32>
    %59 = math.exp %58 : vector<2x32xf32>
    %cst_33 = arith.constant 1.000000e+00 : f32
    %60 = vector.broadcast %cst_33 : f32 to vector<2x32xf32>
    %61 = arith.addf %60, %59 : vector<2x32xf32>
    %62 = arith.divf %60, %61 : vector<2x32xf32>
    %63 = vector.extract_strided_slice %56 {offsets = [0, 32], sizes = [2, 32], strides = [1, 1]} : vector<2x128xf32> to vector<2x32xf32>
    %64 = arith.negf %63 : vector<2x32xf32>
    %65 = math.exp %64 : vector<2x32xf32>
    %cst_34 = arith.constant 1.000000e+00 : f32
    %66 = vector.broadcast %cst_34 : f32 to vector<2x32xf32>
    %67 = arith.addf %66, %65 : vector<2x32xf32>
    %68 = arith.divf %66, %67 : vector<2x32xf32>
    %69 = vector.extract_strided_slice %56 {offsets = [0, 64], sizes = [2, 32], strides = [1, 1]} : vector<2x128xf32> to vector<2x32xf32>
    %70 = math.tanh %69 : vector<2x32xf32>
    %71 = vector.extract_strided_slice %56 {offsets = [0, 96], sizes = [2, 32], strides = [1, 1]} : vector<2x128xf32> to vector<2x32xf32>
    %72 = arith.negf %71 : vector<2x32xf32>
    %73 = math.exp %72 : vector<2x32xf32>
    %cst_35 = arith.constant 1.000000e+00 : f32
    %74 = vector.broadcast %cst_35 : f32 to vector<2x32xf32>
    %75 = arith.addf %74, %73 : vector<2x32xf32>
    %76 = arith.divf %74, %75 : vector<2x32xf32>
    %77 = arith.mulf %68, %45 : vector<2x32xf32>
    %78 = arith.mulf %62, %70 : vector<2x32xf32>
    %79 = arith.addf %77, %78 : vector<2x32xf32>
    %80 = math.tanh %79 : vector<2x32xf32>
    %81 = arith.mulf %76, %80 : vector<2x32xf32>
    %c0_36 = arith.constant 0 : index
    %82 = arith.index_cast %c1_i32 : i32 to index
    %c0_37 = arith.constant 0 : index
    %c0_38 = arith.constant 0 : index
    %83 = vector.load %arg7[%c0_36, %82, %c0_37, %c0_38] : memref<1x8x2x32xf32, #tpu.memory_space<vmem>>, vector<1x1x2x32xf32>
    %84 = vector.shape_cast %83 : vector<1x1x2x32xf32> to vector<2x32xf32>
    %85 = vector.shape_cast %81 : vector<2x32xf32> to vector<1x1x2x32xf32>
    tpu.vector_store %arg7[%c0_36, %82, %c0_37, %c0_38], %85 {strides = array<i32>} : memref<1x8x2x32xf32, #tpu.memory_space<vmem>>, vector<1x1x2x32xf32>,
    %c2_i32 = arith.constant 2 : i32
    %86 = arith.index_cast %c2_i32 : i32 to index
    %c0_39 = arith.constant 0 : index
    %c0_40 = arith.constant 0 : index
    %87 = vector.load %arg10[%86, %c0_39, %c0_40] : memref<8x2x128xf32, #tpu.memory_space<vmem>>, vector<1x2x128xf32>
    %88 = vector.shape_cast %87 : vector<1x2x128xf32> to vector<2x128xf32>
    %cst_41 = arith.constant dense<0.000000e+00> : vector<2x128xf32>
    %89 = tpu.matmul %81, %13, %cst_41 {dimension_numbers = #tpu.dot_dimension_numbers<[1], [0], [0], [1], [0, 0, 1, 1], [], []>} : vector<2x32xf32>, vector<32x128xf32>, vector<2x128xf32> -> vector<2x128xf32>
    %90 = arith.addf %88, %89 : vector<2x128xf32>
    %91 = vector.extract_strided_slice %90 {offsets = [0, 0], sizes = [2, 32], strides = [1, 1]} : vector<2x128xf32> to vector<2x32xf32>
    %92 = arith.negf %91 : vector<2x32xf32>
    %93 = math.exp %92 : vector<2x32xf32>
    %cst_42 = arith.constant 1.000000e+00 : f32
    %94 = vector.broadcast %cst_42 : f32 to vector<2x32xf32>
    %95 = arith.addf %94, %93 : vector<2x32xf32>
    %96 = arith.divf %94, %95 : vector<2x32xf32>
    %97 = vector.extract_strided_slice %90 {offsets = [0, 32], sizes = [2, 32], strides = [1, 1]} : vector<2x128xf32> to vector<2x32xf32>
    %98 = arith.negf %97 : vector<2x32xf32>
    %99 = math.exp %98 : vector<2x32xf32>
    %cst_43 = arith.constant 1.000000e+00 : f32
    %100 = vector.broadcast %cst_43 : f32 to vector<2x32xf32>
    %101 = arith.addf %100, %99 : vector<2x32xf32>
    %102 = arith.divf %100, %101 : vector<2x32xf32>
    %103 = vector.extract_strided_slice %90 {offsets = [0, 64], sizes = [2, 32], strides = [1, 1]} : vector<2x128xf32> to vector<2x32xf32>
    %104 = math.tanh %103 : vector<2x32xf32>
    %105 = vector.extract_strided_slice %90 {offsets = [0, 96], sizes = [2, 32], strides = [1, 1]} : vector<2x128xf32> to vector<2x32xf32>
    %106 = arith.negf %105 : vector<2x32xf32>
    %107 = math.exp %106 : vector<2x32xf32>
    %cst_44 = arith.constant 1.000000e+00 : f32
    %108 = vector.broadcast %cst_44 : f32 to vector<2x32xf32>
    %109 = arith.addf %108, %107 : vector<2x32xf32>
    %110 = arith.divf %108, %109 : vector<2x32xf32>
    %111 = arith.mulf %102, %79 : vector<2x32xf32>
    %112 = arith.mulf %96, %104 : vector<2x32xf32>
    %113 = arith.addf %111, %112 : vector<2x32xf32>
    %114 = math.tanh %113 : vector<2x32xf32>
    %115 = arith.mulf %110, %114 : vector<2x32xf32>
    %c0_45 = arith.constant 0 : index
    %116 = arith.index_cast %c2_i32 : i32 to index
    %c0_46 = arith.constant 0 : index
    %c0_47 = arith.constant 0 : index
    %117 = vector.load %arg7[%c0_45, %116, %c0_46, %c0_47] : memref<1x8x2x32xf32, #tpu.memory_space<vmem>>, vector<1x1x2x32xf32>
    %118 = vector.shape_cast %117 : vector<1x1x2x32xf32> to vector<2x32xf32>
    %119 = vector.shape_cast %115 : vector<2x32xf32> to vector<1x1x2x32xf32>
    tpu.vector_store %arg7[%c0_45, %116, %c0_46, %c0_47], %119 {strides = array<i32>} : memref<1x8x2x32xf32, #tpu.memory_space<vmem>>, vector<1x1x2x32xf32>,
    %c3_i32 = arith.constant 3 : i32
    %120 = arith.index_cast %c3_i32 : i32 to index
    %c0_48 = arith.constant 0 : index
    %c0_49 = arith.constant 0 : index
    %121 = vector.load %arg10[%120, %c0_48, %c0_49] : memref<8x2x128xf32, #tpu.memory_space<vmem>>, vector<1x2x128xf32>
    %122 = vector.shape_cast %121 : vector<1x2x128xf32> to vector<2x128xf32>
    %cst_50 = arith.constant dense<0.000000e+00> : vector<2x128xf32>
    %123 = tpu.matmul %115, %13, %cst_50 {dimension_numbers = #tpu.dot_dimension_numbers<[1], [0], [0], [1], [0, 0, 1, 1], [], []>} : vector<2x32xf32>, vector<32x128xf32>, vector<2x128xf32> -> vector<2x128xf32>
    %124 = arith.addf %122, %123 : vector<2x128xf32>
    %125 = vector.extract_strided_slice %124 {offsets = [0, 0], sizes = [2, 32], strides = [1, 1]} : vector<2x128xf32> to vector<2x32xf32>
    %126 = arith.negf %125 : vector<2x32xf32>
    %127 = math.exp %126 : vector<2x32xf32>
    %cst_51 = arith.constant 1.000000e+00 : f32
    %128 = vector.broadcast %cst_51 : f32 to vector<2x32xf32>
    %129 = arith.addf %128, %127 : vector<2x32xf32>
    %130 = arith.divf %128, %129 : vector<2x32xf32>
    %131 = vector.extract_strided_slice %124 {offsets = [0, 32], sizes = [2, 32], strides = [1, 1]} : vector<2x128xf32> to vector<2x32xf32>
    %132 = arith.negf %131 : vector<2x32xf32>
    %133 = math.exp %132 : vector<2x32xf32>
    %cst_52 = arith.constant 1.000000e+00 : f32
    %134 = vector.broadcast %cst_52 : f32 to vector<2x32xf32>
    %135 = arith.addf %134, %133 : vector<2x32xf32>
    %136 = arith.divf %134, %135 : vector<2x32xf32>
    %137 = vector.extract_strided_slice %124 {offsets = [0, 64], sizes = [2, 32], strides = [1, 1]} : vector<2x128xf32> to vector<2x32xf32>
    %138 = math.tanh %137 : vector<2x32xf32>
    %139 = vector.extract_strided_slice %124 {offsets = [0, 96], sizes = [2, 32], strides = [1, 1]} : vector<2x128xf32> to vector<2x32xf32>
    %140 = arith.negf %139 : vector<2x32xf32>
    %141 = math.exp %140 : vector<2x32xf32>
    %cst_53 = arith.constant 1.000000e+00 : f32
    %142 = vector.broadcast %cst_53 : f32 to vector<2x32xf32>
    %143 = arith.addf %142, %141 : vector<2x32xf32>
    %144 = arith.divf %142, %143 : vector<2x32xf32>
    %145 = arith.mulf %136, %113 : vector<2x32xf32>
    %146 = arith.mulf %130, %138 : vector<2x32xf32>
    %147 = arith.addf %145, %146 : vector<2x32xf32>
    %148 = math.tanh %147 : vector<2x32xf32>
    %149 = arith.mulf %144, %148 : vector<2x32xf32>
    %c0_54 = arith.constant 0 : index
    %150 = arith.index_cast %c3_i32 : i32 to index
    %c0_55 = arith.constant 0 : index
    %c0_56 = arith.constant 0 : index
    %151 = vector.load %arg7[%c0_54, %150, %c0_55, %c0_56] : memref<1x8x2x32xf32, #tpu.memory_space<vmem>>, vector<1x1x2x32xf32>
    %152 = vector.shape_cast %151 : vector<1x1x2x32xf32> to vector<2x32xf32>
    %153 = vector.shape_cast %149 : vector<2x32xf32> to vector<1x1x2x32xf32>
    tpu.vector_store %arg7[%c0_54, %150, %c0_55, %c0_56], %153 {strides = array<i32>} : memref<1x8x2x32xf32, #tpu.memory_space<vmem>>, vector<1x1x2x32xf32>,
    %c4_i32 = arith.constant 4 : i32
    %154 = arith.index_cast %c4_i32 : i32 to index
    %c0_57 = arith.constant 0 : index
    %c0_58 = arith.constant 0 : index
    %155 = vector.load %arg10[%154, %c0_57, %c0_58] : memref<8x2x128xf32, #tpu.memory_space<vmem>>, vector<1x2x128xf32>
    %156 = vector.shape_cast %155 : vector<1x2x128xf32> to vector<2x128xf32>
    %cst_59 = arith.constant dense<0.000000e+00> : vector<2x128xf32>
    %157 = tpu.matmul %149, %13, %cst_59 {dimension_numbers = #tpu.dot_dimension_numbers<[1], [0], [0], [1], [0, 0, 1, 1], [], []>} : vector<2x32xf32>, vector<32x128xf32>, vector<2x128xf32> -> vector<2x128xf32>
    %158 = arith.addf %156, %157 : vector<2x128xf32>
    %159 = vector.extract_strided_slice %158 {offsets = [0, 0], sizes = [2, 32], strides = [1, 1]} : vector<2x128xf32> to vector<2x32xf32>
    %160 = arith.negf %159 : vector<2x32xf32>
    %161 = math.exp %160 : vector<2x32xf32>
    %cst_60 = arith.constant 1.000000e+00 : f32
    %162 = vector.broadcast %cst_60 : f32 to vector<2x32xf32>
    %163 = arith.addf %162, %161 : vector<2x32xf32>
    %164 = arith.divf %162, %163 : vector<2x32xf32>
    %165 = vector.extract_strided_slice %158 {offsets = [0, 32], sizes = [2, 32], strides = [1, 1]} : vector<2x128xf32> to vector<2x32xf32>
    %166 = arith.negf %165 : vector<2x32xf32>
    %167 = math.exp %166 : vector<2x32xf32>
    %cst_61 = arith.constant 1.000000e+00 : f32
    %168 = vector.broadcast %cst_61 : f32 to vector<2x32xf32>
    %169 = arith.addf %168, %167 : vector<2x32xf32>
    %170 = arith.divf %168, %169 : vector<2x32xf32>
    %171 = vector.extract_strided_slice %158 {offsets = [0, 64], sizes = [2, 32], strides = [1, 1]} : vector<2x128xf32> to vector<2x32xf32>
    %172 = math.tanh %171 : vector<2x32xf32>
    %173 = vector.extract_strided_slice %158 {offsets = [0, 96], sizes = [2, 32], strides = [1, 1]} : vector<2x128xf32> to vector<2x32xf32>
    %174 = arith.negf %173 : vector<2x32xf32>
    %175 = math.exp %174 : vector<2x32xf32>
    %cst_62 = arith.constant 1.000000e+00 : f32
    %176 = vector.broadcast %cst_62 : f32 to vector<2x32xf32>
    %177 = arith.addf %176, %175 : vector<2x32xf32>
    %178 = arith.divf %176, %177 : vector<2x32xf32>
    %179 = arith.mulf %170, %147 : vector<2x32xf32>
    %180 = arith.mulf %164, %172 : vector<2x32xf32>
    %181 = arith.addf %179, %180 : vector<2x32xf32>
    %182 = math.tanh %181 : vector<2x32xf32>
    %183 = arith.mulf %178, %182 : vector<2x32xf32>
    %c0_63 = arith.constant 0 : index
    %184 = arith.index_cast %c4_i32 : i32 to index
    %c0_64 = arith.constant 0 : index
    %c0_65 = arith.constant 0 : index
    %185 = vector.load %arg7[%c0_63, %184, %c0_64, %c0_65] : memref<1x8x2x32xf32, #tpu.memory_space<vmem>>, vector<1x1x2x32xf32>
    %186 = vector.shape_cast %185 : vector<1x1x2x32xf32> to vector<2x32xf32>
    %187 = vector.shape_cast %183 : vector<2x32xf32> to vector<1x1x2x32xf32>
    tpu.vector_store %arg7[%c0_63, %184, %c0_64, %c0_65], %187 {strides = array<i32>} : memref<1x8x2x32xf32, #tpu.memory_space<vmem>>, vector<1x1x2x32xf32>,
    %c5_i32 = arith.constant 5 : i32
    %188 = arith.index_cast %c5_i32 : i32 to index
    %c0_66 = arith.constant 0 : index
    %c0_67 = arith.constant 0 : index
    %189 = vector.load %arg10[%188, %c0_66, %c0_67] : memref<8x2x128xf32, #tpu.memory_space<vmem>>, vector<1x2x128xf32>
    %190 = vector.shape_cast %189 : vector<1x2x128xf32> to vector<2x128xf32>
    %cst_68 = arith.constant dense<0.000000e+00> : vector<2x128xf32>
    %191 = tpu.matmul %183, %13, %cst_68 {dimension_numbers = #tpu.dot_dimension_numbers<[1], [0], [0], [1], [0, 0, 1, 1], [], []>} : vector<2x32xf32>, vector<32x128xf32>, vector<2x128xf32> -> vector<2x128xf32>
    %192 = arith.addf %190, %191 : vector<2x128xf32>
    %193 = vector.extract_strided_slice %192 {offsets = [0, 0], sizes = [2, 32], strides = [1, 1]} : vector<2x128xf32> to vector<2x32xf32>
    %194 = arith.negf %193 : vector<2x32xf32>
    %195 = math.exp %194 : vector<2x32xf32>
    %cst_69 = arith.constant 1.000000e+00 : f32
    %196 = vector.broadcast %cst_69 : f32 to vector<2x32xf32>
    %197 = arith.addf %196, %195 : vector<2x32xf32>
    %198 = arith.divf %196, %197 : vector<2x32xf32>
    %199 = vector.extract_strided_slice %192 {offsets = [0, 32], sizes = [2, 32], strides = [1, 1]} : vector<2x128xf32> to vector<2x32xf32>
    %200 = arith.negf %199 : vector<2x32xf32>
    %201 = math.exp %200 : vector<2x32xf32>
    %cst_70 = arith.constant 1.000000e+00 : f32
    %202 = vector.broadcast %cst_70 : f32 to vector<2x32xf32>
    %203 = arith.addf %202, %201 : vector<2x32xf32>
    %204 = arith.divf %202, %203 : vector<2x32xf32>
    %205 = vector.extract_strided_slice %192 {offsets = [0, 64], sizes = [2, 32], strides = [1, 1]} : vector<2x128xf32> to vector<2x32xf32>
    %206 = math.tanh %205 : vector<2x32xf32>
    %207 = vector.extract_strided_slice %192 {offsets = [0, 96], sizes = [2, 32], strides = [1, 1]} : vector<2x128xf32> to vector<2x32xf32>
    %208 = arith.negf %207 : vector<2x32xf32>
    %209 = math.exp %208 : vector<2x32xf32>
    %cst_71 = arith.constant 1.000000e+00 : f32
    %210 = vector.broadcast %cst_71 : f32 to vector<2x32xf32>
    %211 = arith.addf %210, %209 : vector<2x32xf32>
    %212 = arith.divf %210, %211 : vector<2x32xf32>
    %213 = arith.mulf %204, %181 : vector<2x32xf32>
    %214 = arith.mulf %198, %206 : vector<2x32xf32>
    %215 = arith.addf %213, %214 : vector<2x32xf32>
    %216 = math.tanh %215 : vector<2x32xf32>
    %217 = arith.mulf %212, %216 : vector<2x32xf32>
    %c0_72 = arith.constant 0 : index
    %218 = arith.index_cast %c5_i32 : i32 to index
    %c0_73 = arith.constant 0 : index
    %c0_74 = arith.constant 0 : index
    %219 = vector.load %arg7[%c0_72, %218, %c0_73, %c0_74] : memref<1x8x2x32xf32, #tpu.memory_space<vmem>>, vector<1x1x2x32xf32>
    %220 = vector.shape_cast %219 : vector<1x1x2x32xf32> to vector<2x32xf32>
    %221 = vector.shape_cast %217 : vector<2x32xf32> to vector<1x1x2x32xf32>
    tpu.vector_store %arg7[%c0_72, %218, %c0_73, %c0_74], %221 {strides = array<i32>} : memref<1x8x2x32xf32, #tpu.memory_space<vmem>>, vector<1x1x2x32xf32>,
    %c6_i32 = arith.constant 6 : i32
    %222 = arith.index_cast %c6_i32 : i32 to index
    %c0_75 = arith.constant 0 : index
    %c0_76 = arith.constant 0 : index
    %223 = vector.load %arg10[%222, %c0_75, %c0_76] : memref<8x2x128xf32, #tpu.memory_space<vmem>>, vector<1x2x128xf32>
    %224 = vector.shape_cast %223 : vector<1x2x128xf32> to vector<2x128xf32>
    %cst_77 = arith.constant dense<0.000000e+00> : vector<2x128xf32>
    %225 = tpu.matmul %217, %13, %cst_77 {dimension_numbers = #tpu.dot_dimension_numbers<[1], [0], [0], [1], [0, 0, 1, 1], [], []>} : vector<2x32xf32>, vector<32x128xf32>, vector<2x128xf32> -> vector<2x128xf32>
    %226 = arith.addf %224, %225 : vector<2x128xf32>
    %227 = vector.extract_strided_slice %226 {offsets = [0, 0], sizes = [2, 32], strides = [1, 1]} : vector<2x128xf32> to vector<2x32xf32>
    %228 = arith.negf %227 : vector<2x32xf32>
    %229 = math.exp %228 : vector<2x32xf32>
    %cst_78 = arith.constant 1.000000e+00 : f32
    %230 = vector.broadcast %cst_78 : f32 to vector<2x32xf32>
    %231 = arith.addf %230, %229 : vector<2x32xf32>
    %232 = arith.divf %230, %231 : vector<2x32xf32>
    %233 = vector.extract_strided_slice %226 {offsets = [0, 32], sizes = [2, 32], strides = [1, 1]} : vector<2x128xf32> to vector<2x32xf32>
    %234 = arith.negf %233 : vector<2x32xf32>
    %235 = math.exp %234 : vector<2x32xf32>
    %cst_79 = arith.constant 1.000000e+00 : f32
    %236 = vector.broadcast %cst_79 : f32 to vector<2x32xf32>
    %237 = arith.addf %236, %235 : vector<2x32xf32>
    %238 = arith.divf %236, %237 : vector<2x32xf32>
    %239 = vector.extract_strided_slice %226 {offsets = [0, 64], sizes = [2, 32], strides = [1, 1]} : vector<2x128xf32> to vector<2x32xf32>
    %240 = math.tanh %239 : vector<2x32xf32>
    %241 = vector.extract_strided_slice %226 {offsets = [0, 96], sizes = [2, 32], strides = [1, 1]} : vector<2x128xf32> to vector<2x32xf32>
    %242 = arith.negf %241 : vector<2x32xf32>
    %243 = math.exp %242 : vector<2x32xf32>
    %cst_80 = arith.constant 1.000000e+00 : f32
    %244 = vector.broadcast %cst_80 : f32 to vector<2x32xf32>
    %245 = arith.addf %244, %243 : vector<2x32xf32>
    %246 = arith.divf %244, %245 : vector<2x32xf32>
    %247 = arith.mulf %238, %215 : vector<2x32xf32>
    %248 = arith.mulf %232, %240 : vector<2x32xf32>
    %249 = arith.addf %247, %248 : vector<2x32xf32>
    %250 = math.tanh %249 : vector<2x32xf32>
    %251 = arith.mulf %246, %250 : vector<2x32xf32>
    %c0_81 = arith.constant 0 : index
    %252 = arith.index_cast %c6_i32 : i32 to index
    %c0_82 = arith.constant 0 : index
    %c0_83 = arith.constant 0 : index
    %253 = vector.load %arg7[%c0_81, %252, %c0_82, %c0_83] : memref<1x8x2x32xf32, #tpu.memory_space<vmem>>, vector<1x1x2x32xf32>
    %254 = vector.shape_cast %253 : vector<1x1x2x32xf32> to vector<2x32xf32>
    %255 = vector.shape_cast %251 : vector<2x32xf32> to vector<1x1x2x32xf32>
    tpu.vector_store %arg7[%c0_81, %252, %c0_82, %c0_83], %255 {strides = array<i32>} : memref<1x8x2x32xf32, #tpu.memory_space<vmem>>, vector<1x1x2x32xf32>,
    %c7_i32 = arith.constant 7 : i32
    %256 = arith.index_cast %c7_i32 : i32 to index
    %c0_84 = arith.constant 0 : index
    %c0_85 = arith.constant 0 : index
    %257 = vector.load %arg10[%256, %c0_84, %c0_85] : memref<8x2x128xf32, #tpu.memory_space<vmem>>, vector<1x2x128xf32>
    %258 = vector.shape_cast %257 : vector<1x2x128xf32> to vector<2x128xf32>
    %cst_86 = arith.constant dense<0.000000e+00> : vector<2x128xf32>
    %259 = tpu.matmul %251, %13, %cst_86 {dimension_numbers = #tpu.dot_dimension_numbers<[1], [0], [0], [1], [0, 0, 1, 1], [], []>} : vector<2x32xf32>, vector<32x128xf32>, vector<2x128xf32> -> vector<2x128xf32>
    %260 = arith.addf %258, %259 : vector<2x128xf32>
    %261 = vector.extract_strided_slice %260 {offsets = [0, 0], sizes = [2, 32], strides = [1, 1]} : vector<2x128xf32> to vector<2x32xf32>
    %262 = arith.negf %261 : vector<2x32xf32>
    %263 = math.exp %262 : vector<2x32xf32>
    %cst_87 = arith.constant 1.000000e+00 : f32
    %264 = vector.broadcast %cst_87 : f32 to vector<2x32xf32>
    %265 = arith.addf %264, %263 : vector<2x32xf32>
    %266 = arith.divf %264, %265 : vector<2x32xf32>
    %267 = vector.extract_strided_slice %260 {offsets = [0, 32], sizes = [2, 32], strides = [1, 1]} : vector<2x128xf32> to vector<2x32xf32>
    %268 = arith.negf %267 : vector<2x32xf32>
    %269 = math.exp %268 : vector<2x32xf32>
    %cst_88 = arith.constant 1.000000e+00 : f32
    %270 = vector.broadcast %cst_88 : f32 to vector<2x32xf32>
    %271 = arith.addf %270, %269 : vector<2x32xf32>
    %272 = arith.divf %270, %271 : vector<2x32xf32>
    %273 = vector.extract_strided_slice %260 {offsets = [0, 64], sizes = [2, 32], strides = [1, 1]} : vector<2x128xf32> to vector<2x32xf32>
    %274 = math.tanh %273 : vector<2x32xf32>
    %275 = vector.extract_strided_slice %260 {offsets = [0, 96], sizes = [2, 32], strides = [1, 1]} : vector<2x128xf32> to vector<2x32xf32>
    %276 = arith.negf %275 : vector<2x32xf32>
    %277 = math.exp %276 : vector<2x32xf32>
    %cst_89 = arith.constant 1.000000e+00 : f32
    %278 = vector.broadcast %cst_89 : f32 to vector<2x32xf32>
    %279 = arith.addf %278, %277 : vector<2x32xf32>
    %280 = arith.divf %278, %279 : vector<2x32xf32>
    %281 = arith.mulf %272, %249 : vector<2x32xf32>
    %282 = arith.mulf %266, %274 : vector<2x32xf32>
    %283 = arith.addf %281, %282 : vector<2x32xf32>
    %284 = math.tanh %283 : vector<2x32xf32>
    %285 = arith.mulf %280, %284 : vector<2x32xf32>
    %c0_90 = arith.constant 0 : index
    %286 = arith.index_cast %c7_i32 : i32 to index
    %c0_91 = arith.constant 0 : index
    %c0_92 = arith.constant 0 : index
    %287 = vector.load %arg7[%c0_90, %286, %c0_91, %c0_92] : memref<1x8x2x32xf32, #tpu.memory_space<vmem>>, vector<1x1x2x32xf32>
    %288 = vector.shape_cast %287 : vector<1x1x2x32xf32> to vector<2x32xf32>
    %289 = vector.shape_cast %285 : vector<2x32xf32> to vector<1x1x2x32xf32>
    tpu.vector_store %arg7[%c0_90, %286, %c0_91, %c0_92], %289 {strides = array<i32>} : memref<1x8x2x32xf32, #tpu.memory_space<vmem>>, vector<1x1x2x32xf32>,
    %c8_i32 = arith.constant 8 : i32
    %c0_93 = arith.constant 0 : index
    %c0_94 = arith.constant 0 : index
    %c0_95 = arith.constant 0 : index
    %290 = vector.load %arg8[%c0_93, %c0_94, %c0_95] : memref<1x2x32xf32, #tpu.memory_space<vmem>>, vector<1x2x32xf32>
    %291 = vector.shape_cast %290 : vector<1x2x32xf32> to vector<2x32xf32>
    %292 = vector.shape_cast %285 : vector<2x32xf32> to vector<1x2x32xf32>
    tpu.vector_store %arg8[%c0_93, %c0_94, %c0_95], %292 {strides = array<i32>} : memref<1x2x32xf32, #tpu.memory_space<vmem>>, vector<1x2x32xf32>,
    %c0_96 = arith.constant 0 : index
    %c0_97 = arith.constant 0 : index
    %c0_98 = arith.constant 0 : index
    %293 = vector.load %arg9[%c0_96, %c0_97, %c0_98] : memref<1x2x32xf32, #tpu.memory_space<vmem>>, vector<1x2x32xf32>
    %294 = vector.shape_cast %293 : vector<1x2x32xf32> to vector<2x32xf32>
    %295 = vector.shape_cast %283 : vector<2x32xf32> to vector<1x2x32xf32>
    tpu.vector_store %arg9[%c0_96, %c0_97, %c0_98], %295 {strides = array<i32>} : memref<1x2x32xf32, #tpu.memory_space<vmem>>, vector<1x2x32xf32>,
    return
  }
  func.func @transform_0(%arg0: i32) -> (i32, i32, i32, i32) {
    %c0_i32 = arith.constant 0 : i32
    %c0_i32_0 = arith.constant 0 : i32
    %c0_i32_1 = arith.constant 0 : i32
    %c0_i32_2 = arith.constant 0 : i32
    return %arg0, %c0_i32, %c0_i32_0, %c0_i32_1 : i32, i32, i32, i32
  }
  func.func @transform_1(%arg0: i32) -> (i32, i32, i32) {
    %c0_i32 = arith.constant 0 : i32
    %c0_i32_0 = arith.constant 0 : i32
    %c0_i32_1 = arith.constant 0 : i32
    return %arg0, %c0_i32, %c0_i32_0 : i32, i32, i32
  }
  func.func @transform_2(%arg0: i32) -> (i32, i32, i32) {
    %c0_i32 = arith.constant 0 : i32
    %c0_i32_0 = arith.constant 0 : i32
    %c0_i32_1 = arith.constant 0 : i32
    return %arg0, %c0_i32, %c0_i32_0 : i32, i32, i32
  }
  func.func @transform_3(%arg0: i32) -> (i32, i32, i32) {
    %c0_i32 = arith.constant 0 : i32
    %c0_i32_0 = arith.constant 0 : i32
    %c0_i32_1 = arith.constant 0 : i32
    return %arg0, %c0_i32, %c0_i32_0 : i32, i32, i32
  }
  func.func @transform_4(%arg0: i32) -> (i32, i32, i32) {
    %c0_i32 = arith.constant 0 : i32
    %c0_i32_0 = arith.constant 0 : i32
    %c0_i32_1 = arith.constant 0 : i32
    return %arg0, %c0_i32, %c0_i32_0 : i32, i32, i32
  }
  func.func @transform_5(%arg0: i32) -> (i32, i32, i32) {
    %c0_i32 = arith.constant 0 : i32
    %c0_i32_0 = arith.constant 0 : i32
    %c0_i32_1 = arith.constant 0 : i32
    return %arg0, %c0_i32, %c0_i32_0 : i32, i32, i32
  }
  func.func @transform_6(%arg0: i32) -> (i32, i32, i32, i32) {
    %c0_i32 = arith.constant 0 : i32
    %c0_i32_0 = arith.constant 0 : i32
    %c0_i32_1 = arith.constant 0 : i32
    %c0_i32_2 = arith.constant 0 : i32
    return %arg0, %c0_i32, %c0_i32_0, %c0_i32_1 : i32, i32, i32, i32
  }
  func.func @transform_7(%arg0: i32) -> (i32, i32, i32) {
    %c0_i32 = arith.constant 0 : i32
    %c0_i32_0 = arith.constant 0 : i32
    %c0_i32_1 = arith.constant 0 : i32
    return %arg0, %c0_i32, %c0_i32_0 : i32, i32, i32
  }
  func.func @transform_8(%arg0: i32) -> (i32, i32, i32) {
    %c0_i32 = arith.constant 0 : i32
    %c0_i32_0 = arith.constant 0 : i32
    %c0_i32_1 = arith.constant 0 : i32
    return %arg0, %c0_i32, %c0_i32_0 : i32, i32, i32
  }
}

module attributes {stable_mosaic.version = 11 : i64} {
  func.func @_head_kernel(%arg0: memref<8x2x32xf32, #tpu.memory_space<vmem>>, %arg1: memref<8x2x32xf32, #tpu.memory_space<vmem>>, %arg2: memref<32x16xf32, #tpu.memory_space<vmem>>, %arg3: memref<1x16xf32, #tpu.memory_space<vmem>>, %arg4: memref<32x16xf32, #tpu.memory_space<vmem>>, %arg5: memref<1x16xf32, #tpu.memory_space<vmem>>, %arg6: memref<16x3xf32, #tpu.memory_space<vmem>>, %arg7: memref<1x3xf32, #tpu.memory_space<vmem>>, %arg8: memref<8x2x3xf32, #tpu.memory_space<vmem>>) attributes {dimension_semantics = [], scalar_prefetch = 0 : i64, scratch_operands = 0 : i64, tpu.core_type = #tpu.core_type<tc>} {
    %c0 = arith.constant 0 : index
    %c0_0 = arith.constant 0 : index
    %c0_1 = arith.constant 0 : index
    %0 = vector.load %arg0[%c0, %c0_0, %c0_1] : memref<8x2x32xf32, #tpu.memory_space<vmem>>, vector<8x2x32xf32>
    %1 = vector.shape_cast %0 : vector<8x2x32xf32> to vector<16x32xf32>
    %c0_2 = arith.constant 0 : index
    %c0_3 = arith.constant 0 : index
    %c0_4 = arith.constant 0 : index
    %2 = vector.load %arg1[%c0_2, %c0_3, %c0_4] : memref<8x2x32xf32, #tpu.memory_space<vmem>>, vector<8x2x32xf32>
    %3 = vector.shape_cast %2 : vector<8x2x32xf32> to vector<16x32xf32>
    %c0_5 = arith.constant 0 : index
    %c0_6 = arith.constant 0 : index
    %4 = vector.load %arg2[%c0_5, %c0_6] : memref<32x16xf32, #tpu.memory_space<vmem>>, vector<32x16xf32>
    %cst = arith.constant dense<0.000000e+00> : vector<16x16xf32>
    %5 = tpu.matmul %1, %4, %cst {dimension_numbers = #tpu.dot_dimension_numbers<[1], [0], [0], [1], [0, 0, 1, 1], [], []>} : vector<16x32xf32>, vector<32x16xf32>, vector<16x16xf32> -> vector<16x16xf32>
    %c0_7 = arith.constant 0 : index
    %c0_8 = arith.constant 0 : index
    %6 = vector.load %arg3[%c0_7, %c0_8] : memref<1x16xf32, #tpu.memory_space<vmem>>, vector<1x16xf32>
    %7 = vector.broadcast %6 : vector<1x16xf32> to vector<16x16xf32>
    %8 = arith.addf %5, %7 : vector<16x16xf32>
    %c0_9 = arith.constant 0 : index
    %c0_10 = arith.constant 0 : index
    %9 = vector.load %arg4[%c0_9, %c0_10] : memref<32x16xf32, #tpu.memory_space<vmem>>, vector<32x16xf32>
    %cst_11 = arith.constant dense<0.000000e+00> : vector<16x16xf32>
    %10 = tpu.matmul %3, %9, %cst_11 {dimension_numbers = #tpu.dot_dimension_numbers<[1], [0], [0], [1], [0, 0, 1, 1], [], []>} : vector<16x32xf32>, vector<32x16xf32>, vector<16x16xf32> -> vector<16x16xf32>
    %11 = arith.addf %8, %10 : vector<16x16xf32>
    %c0_12 = arith.constant 0 : index
    %c0_13 = arith.constant 0 : index
    %12 = vector.load %arg5[%c0_12, %c0_13] : memref<1x16xf32, #tpu.memory_space<vmem>>, vector<1x16xf32>
    %13 = vector.broadcast %12 : vector<1x16xf32> to vector<16x16xf32>
    %14 = arith.addf %11, %13 : vector<16x16xf32>
    %c0_14 = arith.constant 0 : index
    %c0_15 = arith.constant 0 : index
    %15 = vector.load %arg6[%c0_14, %c0_15] : memref<16x3xf32, #tpu.memory_space<vmem>>, vector<16x3xf32>
    %cst_16 = arith.constant dense<0.000000e+00> : vector<16x3xf32>
    %16 = tpu.matmul %14, %15, %cst_16 {dimension_numbers = #tpu.dot_dimension_numbers<[1], [0], [0], [1], [0, 0, 1, 1], [], []>} : vector<16x16xf32>, vector<16x3xf32>, vector<16x3xf32> -> vector<16x3xf32>
    %c0_17 = arith.constant 0 : index
    %c0_18 = arith.constant 0 : index
    %17 = vector.load %arg7[%c0_17, %c0_18] : memref<1x3xf32, #tpu.memory_space<vmem>>, vector<1x3xf32>
    %18 = vector.broadcast %17 : vector<1x3xf32> to vector<16x3xf32>
    %19 = arith.addf %16, %18 : vector<16x3xf32>
    %cst_19 = arith.constant dense<0xFF800000> : vector<16xf32>
    %20 = vector.multi_reduction <maximumf>, %19, %cst_19 [1] : vector<16x3xf32> to vector<16xf32>
    %21 = vector.shape_cast %20 : vector<16xf32> to vector<16x1xf32>
    %22 = vector.broadcast %21 : vector<16x1xf32> to vector<16x3xf32>
    %23 = arith.subf %19, %22 : vector<16x3xf32>
    %24 = math.exp %23 : vector<16x3xf32>
    %cst_20 = arith.constant dense<0.000000e+00> : vector<16xf32>
    %25 = vector.multi_reduction <add>, %24, %cst_20 [1] : vector<16x3xf32> to vector<16xf32>
    %26 = vector.shape_cast %25 : vector<16xf32> to vector<16x1xf32>
    %27 = vector.broadcast %26 : vector<16x1xf32> to vector<16x3xf32>
    %28 = arith.divf %24, %27 : vector<16x3xf32>
    %29 = vector.shape_cast %28 : vector<16x3xf32> to vector<8x2x3xf32>
    %c0_21 = arith.constant 0 : index
    %c0_22 = arith.constant 0 : index
    %c0_23 = arith.constant 0 : index
    %30 = vector.load %arg8[%c0_21, %c0_22, %c0_23] : memref<8x2x3xf32, #tpu.memory_space<vmem>>, vector<8x2x3xf32>
    tpu.vector_store %arg8[%c0_21, %c0_22, %c0_23], %29 {strides = array<i32>} : memref<8x2x3xf32, #tpu.memory_space<vmem>>, vector<8x2x3xf32>,
    return
  }
}

</mosaic_0001>

<llo_original>
// kernel: bi_lstm_forward.5
$region0: #{bi_lstm_forward.5}
  #allocation0 [shape = 'u32[]', space=smem, size = 0x4, offset = 0x4, fixed_abs, tag = 'smem constant byte address 0x4 - core index']
  #allocation1 [shape = 'u32[144,128]{1,0:T(1,128)}', space=vmem, size = 0x12000, scoped, tag = 'internal scratch']
  %s0 = inlined_call_operand.vmem [shape: f32[8,2,32], index: 0, kind: input, shape index: {}]
  %s1 = inlined_call_operand.vmem [shape: f32[8,2,32], index: 1, kind: input, shape index: {}]
  %s2 = inlined_call_operand.vmem [shape: f32[32,16], index: 2, kind: input, shape index: {}]
  %s3 = inlined_call_operand.vmem [shape: f32[1,16], index: 3, kind: input, shape index: {}]
  %s4 = inlined_call_operand.vmem [shape: f32[32,16], index: 4, kind: input, shape index: {}]
  %s5 = inlined_call_operand.vmem [shape: f32[1,16], index: 5, kind: input, shape index: {}]
  %s6 = inlined_call_operand.vmem [shape: f32[16,3], index: 6, kind: input, shape index: {}]
  %s7 = inlined_call_operand.vmem [shape: f32[1,3], index: 7, kind: input, shape index: {}]
  %s8 = inlined_call_operand.vmem [shape: f32[8,2,3], index: 8, kind: output, shape index: {}]
  %s9 = sld [smem:[#allocation0]]
  $region42: #{bi_lstm_forward.5} parent=0
    _
  %s11 = ssub.s32 1, %s9
  %s12 = scalar_select 0, %s11, %s9
  // Predicated region
  $region2: #{bi_lstm_forward.5} parent=0 // pred_check
    _
  $region3: #{bi_lstm_forward.5} parent=0 // pred_check_branch
    %14 = sbr.rel (0) target = $region5
  $region4: #{bi_lstm_forward.5} parent=0 // pred_region
    _
  $region5: #{bi_lstm_forward.5} parent=0 // pred_fallthru
    _
  // Predicated region
  $region6: #{bi_lstm_forward.5} parent=0 // pred_check
    _
  $region7: #{bi_lstm_forward.5} parent=0 // pred_check_branch
    %16 = sbr.rel (0) target = $region9
  $region8: #{bi_lstm_forward.5} parent=0 // pred_region
    _
  $region9: #{bi_lstm_forward.5} parent=0 // pred_fallthru
    _
  // Predicated region
  $region10: #{bi_lstm_forward.5} parent=0 // pred_check
    _
  $region11: #{bi_lstm_forward.5} parent=0 // pred_check_branch
    %18 = sbr.rel (0) target = $region13
  $region12: #{bi_lstm_forward.5} parent=0 // pred_region
    _
  $region13: #{bi_lstm_forward.5} parent=0 // pred_fallthru
    _
  // Predicated region
  $region14: #{bi_lstm_forward.5} parent=0 // pred_check
    _
  $region15: #{bi_lstm_forward.5} parent=0 // pred_check_branch
    %20 = sbr.rel (0) target = $region17
  $region16: #{bi_lstm_forward.5} parent=0 // pred_region
    _
  $region17: #{bi_lstm_forward.5} parent=0 // pred_fallthru
    _
  // Predicated region
  $region18: #{bi_lstm_forward.5} parent=0 // pred_check
    _
  $region19: #{bi_lstm_forward.5} parent=0 // pred_check_branch
    %22 = sbr.rel (0) target = $region21
  $region20: #{bi_lstm_forward.5} parent=0 // pred_region
    _
  $region21: #{bi_lstm_forward.5} parent=0 // pred_fallthru
    _
  // Predicated region
  $region22: #{bi_lstm_forward.5} parent=0 // pred_check
    _
  $region23: #{bi_lstm_forward.5} parent=0 // pred_check_branch
    %24 = sbr.rel (0) target = $region25
  $region24: #{bi_lstm_forward.5} parent=0 // pred_region
    _
  $region25: #{bi_lstm_forward.5} parent=0 // pred_fallthru
    _
  // Predicated region
  $region26: #{bi_lstm_forward.5} parent=0 // pred_check
    _
  $region27: #{bi_lstm_forward.5} parent=0 // pred_check_branch
    %26 = sbr.rel (0) target = $region29
  $region28: #{bi_lstm_forward.5} parent=0 // pred_region
    _
  $region29: #{bi_lstm_forward.5} parent=0 // pred_fallthru
    _
  // Predicated region
  $region30: #{bi_lstm_forward.5} parent=0 // pred_check
    _
  $region31: #{bi_lstm_forward.5} parent=0 // pred_check_branch
    %28 = sbr.rel (0) target = $region33
  $region32: #{bi_lstm_forward.5} parent=0 // pred_region
    _
  $region33: #{bi_lstm_forward.5} parent=0 // pred_fallthru
    _
  %v29 = vld [vmem:[%s0] sm:$0x3]
  %v30 = vld [vmem:[%s0 + $0x2] sm:$0x3]
  %v31 = vld [vmem:[%s0 + $0x4] sm:$0x3]
  %v32 = vld [vmem:[%s0 + $0x6] sm:$0x3]
  %v33 = vld [vmem:[%s0 + $0x8] sm:$0x3]
  %v34 = vld [vmem:[%s0 + $0xa] sm:$0x3]
  %v35 = vld [vmem:[%s0 + $0xc] sm:$0x3]
  %v36 = vld [vmem:[%s0 + $0xe] sm:$0x3]
  %v37 = vld [vmem:[%s1] sm:$0x3]
  %v38 = vld [vmem:[%s1 + $0x2] sm:$0x3]
  %v39 = vld [vmem:[%s1 + $0x4] sm:$0x3]
  %v40 = vld [vmem:[%s1 + $0x6] sm:$0x3]
  %v41 = vld [vmem:[%s1 + $0x8] sm:$0x3]
  %v42 = vld [vmem:[%s1 + $0xa] sm:$0x3]
  %v43 = vld [vmem:[%s1 + $0xc] sm:$0x3]
  %v44 = vld [vmem:[%s1 + $0xe] sm:$0x3]
  %v45 = vld [vmem:[%s2] sm:$0xff]
  %v46 = vld [vmem:[%s2 + $0x8] sm:$0xff]
  %v47 = vld [vmem:[%s2 + $0x10] sm:$0xff]
  %v48 = vld [vmem:[%s2 + $0x18] sm:$0xff]
  %v49 = vld [vmem:[%s3] sm:$0x1]
  %v51 = vlaneseq
  %v52 = vshrl.u32 %v51, 7
  %v53 = vsub.s32 0, %v52
  %v54 = vrot.slane %v49, %v53
  %v64 = vcombine.low %v29, %v30
  %v65 = vcombine.low %v31, %v32
  %v67 = vunpack.c.l.s4 1983009808
  %v68 = vunpack.c.0.s8 %v67
  %v69 = vlaneseq
  %v70 = vshrl.u32 %v69, 7
  %v71 = vsub.s32 %v68, %v70
  %v72 = vrot.slane %v64, %v71
  %v74 = vunpack.c.l.s4 1983009808
  %v75 = vunpack.c.0.s8 %v74
  %v76 = vlaneseq
  %v77 = vshrl.u32 %v76, 7
  %v78 = vsub.s32 %v75, %v77
  %v79 = vrot.slane %v65, %v78
  %v80 = vcombine.low %v72, %v79
  %v81 = vcombine.low %v33, %v34
  %v82 = vcombine.low %v35, %v36
  %v84 = vunpack.c.l.s4 1983009808
  %v85 = vunpack.c.0.s8 %v84
  %v86 = vlaneseq
  %v87 = vshrl.u32 %v86, 7
  %v88 = vsub.s32 %v85, %v87
  %v89 = vrot.slane %v81, %v88
  %v91 = vunpack.c.l.s4 1983009808
  %v92 = vunpack.c.0.s8 %v91
  %v93 = vlaneseq
  %v94 = vshrl.u32 %v93, 7
  %v95 = vsub.s32 %v92, %v94
  %v96 = vrot.slane %v82, %v95
  %v97 = vcombine.low %v89, %v96
  %vm98 = vcmask 261120
  %v99 = vsel %vm98, %v80, 0
  %v101 = vsel %vm98, %v97, 0
  %103 = vmatprep.subr.mxu0 0.0
  %104 = vmatpush1.msra.mxu0 %v45
  %105 = vmatprep.subr.mxu0 0.0
  %106 = vmatpush1.msra.mxu0 %v46
  %107 = vmatprep.subr.mxu0 0.0
  %108 = vmatpush1.msra.mxu0 %v47
  %109 = vmatprep.subr.mxu0 0.0
  %110 = vmatpush1.msra.mxu0 %v48
  %111 = vmatprep.subr.mxu0 0.0
  %112 = vmatpush1.msra.mxu0 0.0
  %113 = vmatprep.subr.mxu0 0.0
  %114 = vmatpush1.msra.mxu0 0.0
  %115 = vmatprep.subr.mxu0 0.0
  %116 = vmatpush1.msra.mxu0 0.0
  %117 = vmatprep.subr.mxu0 0.0
  %118 = vmatpush1.msra.mxu0 0.0
  %119 = vmatprep.subr.mxu0 0.0
  %120 = vmatpush1.msra.mxu0 0.0
  %121 = vmatprep.subr.mxu0 0.0
  %122 = vmatpush1.msra.mxu0 0.0
  %123 = vmatprep.subr.mxu0 0.0
  %124 = vmatpush1.msra.mxu0 0.0
  %125 = vmatprep.subr.mxu0 0.0
  %126 = vmatpush1.msra.mxu0 0.0
  %127 = vmatprep.subr.mxu0 0.0
  %128 = vmatpush1.msra.mxu0 0.0
  %129 = vmatprep.subr.mxu0 0.0
  %130 = vmatpush1.msra.mxu0 0.0
  %131 = vmatprep.subr.mxu0 0.0
  %132 = vmatpush1.msra.mxu0 0.0
  %133 = vmatprep.subr.mxu0 0.0
  %134 = vmatpush1.msra.mxu0 0.0
  %135 = vmatprep.subr.mxu0 0.0
  %136 = vmatpush1.msra.mxu0 0.0
  %137 = vmatprep.subr.mxu0 0.0
  %138 = vmatpush1.msra.mxu0 0.0
  %139 = vmatprep.subr.mxu0 0.0
  %140 = vmatpush1.msra.mxu0 0.0
  %141 = vmatprep.subr.mxu0 0.0
  %142 = vmatpush1.msra.mxu0 0.0
  %143 = vmatprep.subr.mxu0 0.0
  %144 = vmatpush1.msra.mxu0 0.0
  %145 = vmatprep.subr.mxu0 0.0
  %146 = vmatpush1.msra.mxu0 0.0
  %147 = vmatprep.subr.mxu0 0.0
  %148 = vmatpush1.msra.mxu0 0.0
  %149 = vmatprep.subr.mxu0 0.0
  %150 = vmatpush1.msra.mxu0 0.0
  %151 = vmatprep.subr.mxu0 0.0
  %152 = vmatpush1.msra.mxu0 0.0
  %153 = vmatprep.subr.mxu0 0.0
  %154 = vmatpush1.msra.mxu0 0.0
  %155 = vmatprep.subr.mxu0 0.0
  %156 = vmatpush1.msra.mxu0 0.0
  %157 = vmatprep.subr.mxu0 0.0
  %158 = vmatpush1.msra.mxu0 0.0
  %159 = vmatprep.subr.mxu0 0.0
  %160 = vmatpush1.msra.mxu0 0.0
  %161 = vmatprep.subr.mxu0 0.0
  %162 = vmatpush1.msra.mxu0 0.0
  %163 = vmatprep.subr.mxu0 0.0
  %164 = vmatpush1.msra.mxu0 0.0
  %165 = vmatprep.subr.mxu0 0.0
  %166 = vmatpush1.msra.mxu0 0.0
  %167 = vmatprep.mubr.f32.mxu0 0.0
  %168 = vmatmul.mubr.f32.gmra.mrb[0].mxu0 %v99
  %v169 = vpop.f32.mrb[0].mxu0
  %v170 = vadd.f32 %v54, %v169
  %v171 = vpop.f32.mrb[0].mxu0
  %172 = vmatprep.mubr.f32.mxu0 0.0
  %173 = vmatmul.mubr.f32.gmra.mrb[0].mxu0 %v101
  %v174 = vpop.f32.mrb[0].mxu0
  %v175 = vadd.f32 %v54, %v174
  %v176 = vpop.f32.mrb[0].mxu0
  %177 = vdwg.mxu0
  %v178 = vld [vmem:[%s4] sm:$0xff]
  %v179 = vld [vmem:[%s4 + $0x8] sm:$0xff]
  %v180 = vld [vmem:[%s4 + $0x10] sm:$0xff]
  %v181 = vld [vmem:[%s4 + $0x18] sm:$0xff]
  %v190 = vcombine.low %v37, %v38
  %v191 = vcombine.low %v39, %v40
  %v193 = vunpack.c.l.s4 1983009808
  %v194 = vunpack.c.0.s8 %v193
  %v195 = vlaneseq
  %v196 = vshrl.u32 %v195, 7
  %v197 = vsub.s32 %v194, %v196
  %v198 = vrot.slane %v190, %v197
  %v200 = vunpack.c.l.s4 1983009808
  %v201 = vunpack.c.0.s8 %v200
  %v202 = vlaneseq
  %v203 = vshrl.u32 %v202, 7
  %v204 = vsub.s32 %v201, %v203
  %v205 = vrot.slane %v191, %v204
  %v206 = vcombine.low %v198, %v205
  %v207 = vcombine.low %v41, %v42
  %v208 = vcombine.low %v43, %v44
  %v210 = vunpack.c.l.s4 1983009808
  %v211 = vunpack.c.0.s8 %v210
  %v212 = vlaneseq
  %v213 = vshrl.u32 %v212, 7
  %v214 = vsub.s32 %v211, %v213
  %v215 = vrot.slane %v207, %v214
  %v217 = vunpack.c.l.s4 1983009808
  %v218 = vunpack.c.0.s8 %v217
  %v219 = vlaneseq
  %v220 = vshrl.u32 %v219, 7
  %v221 = vsub.s32 %v218, %v220
  %v222 = vrot.slane %v208, %v221
  %v223 = vcombine.low %v215, %v222
  %v224 = vsel %vm98, %v206, 0
  %v226 = vsel %vm98, %v223, 0
  %228 = vmatprep.subr.mxu0 0.0
  %229 = vmatpush1.msra.mxu0 %v178
  %230 = vmatprep.subr.mxu0 0.0
  %231 = vmatpush1.msra.mxu0 %v179
  %232 = vmatprep.subr.mxu0 0.0
  %233 = vmatpush1.msra.mxu0 %v180
  %234 = vmatprep.subr.mxu0 0.0
  %235 = vmatpush1.msra.mxu0 %v181
  %236 = vmatprep.subr.mxu0 0.0
  %237 = vmatpush1.msra.mxu0 0.0
  %238 = vmatprep.subr.mxu0 0.0
  %239 = vmatpush1.msra.mxu0 0.0
  %240 = vmatprep.subr.mxu0 0.0
  %241 = vmatpush1.msra.mxu0 0.0
  %242 = vmatprep.subr.mxu0 0.0
  %243 = vmatpush1.msra.mxu0 0.0
  %244 = vmatprep.subr.mxu0 0.0
  %245 = vmatpush1.msra.mxu0 0.0
  %246 = vmatprep.subr.mxu0 0.0
  %247 = vmatpush1.msra.mxu0 0.0
  %248 = vmatprep.subr.mxu0 0.0
  %249 = vmatpush1.msra.mxu0 0.0
  %250 = vmatprep.subr.mxu0 0.0
  %251 = vmatpush1.msra.mxu0 0.0
  %252 = vmatprep.subr.mxu0 0.0
  %253 = vmatpush1.msra.mxu0 0.0
  %254 = vmatprep.subr.mxu0 0.0
  %255 = vmatpush1.msra.mxu0 0.0
  %256 = vmatprep.subr.mxu0 0.0
  %257 = vmatpush1.msra.mxu0 0.0
  %258 = vmatprep.subr.mxu0 0.0
  %259 = vmatpush1.msra.mxu0 0.0
  %260 = vmatprep.subr.mxu0 0.0
  %261 = vmatpush1.msra.mxu0 0.0
  %262 = vmatprep.subr.mxu0 0.0
  %263 = vmatpush1.msra.mxu0 0.0
  %264 = vmatprep.subr.mxu0 0.0
  %265 = vmatpush1.msra.mxu0 0.0
  %266 = vmatprep.subr.mxu0 0.0
  %267 = vmatpush1.msra.mxu0 0.0
  %268 = vmatprep.subr.mxu0 0.0
  %269 = vmatpush1.msra.mxu0 0.0
  %270 = vmatprep.subr.mxu0 0.0
  %271 = vmatpush1.msra.mxu0 0.0
  %272 = vmatprep.subr.mxu0 0.0
  %273 = vmatpush1.msra.mxu0 0.0
  %274 = vmatprep.subr.mxu0 0.0
  %275 = vmatpush1.msra.mxu0 0.0
  %276 = vmatprep.subr.mxu0 0.0
  %277 = vmatpush1.msra.mxu0 0.0
  %278 = vmatprep.subr.mxu0 0.0
  %279 = vmatpush1.msra.mxu0 0.0
  %280 = vmatprep.subr.mxu0 0.0
  %281 = vmatpush1.msra.mxu0 0.0
  %282 = vmatprep.subr.mxu0 0.0
  %283 = vmatpush1.msra.mxu0 0.0
  %284 = vmatprep.subr.mxu0 0.0
  %285 = vmatpush1.msra.mxu0 0.0
  %286 = vmatprep.subr.mxu0 0.0
  %287 = vmatpush1.msra.mxu0 0.0
  %288 = vmatprep.subr.mxu0 0.0
  %289 = vmatpush1.msra.mxu0 0.0
  %290 = vmatprep.subr.mxu0 0.0
  %291 = vmatpush1.msra.mxu0 0.0
  %292 = vmatprep.mubr.f32.mxu0 0.0
  %293 = vmatmul.mubr.f32.gmra.mrb[0].mxu0 %v224
  %v294 = vpop.f32.mrb[0].mxu0
  %v295 = vadd.f32 0.0, %v294
  %v296 = vpop.f32.mrb[0].mxu0
  %297 = vmatprep.mubr.f32.mxu0 0.0
  %298 = vmatmul.mubr.f32.gmra.mrb[0].mxu0 %v226
  %v299 = vpop.f32.mrb[0].mxu0
  %v300 = vadd.f32 0.0, %v299
  %v301 = vpop.f32.mrb[0].mxu0
  %302 = vdwg.mxu0
  %v303 = vadd.f32 %v170, %v295
  %v304 = vadd.f32 %v175, %v300
  %v305 = vld [vmem:[%s5] sm:$0x1]
  %v307 = vlaneseq
  %v308 = vshrl.u32 %v307, 7
  %v309 = vsub.s32 0, %v308
  %v310 = vrot.slane %v305, %v309
  %v312 = vadd.f32 %v303, %v310
  %v313 = vadd.f32 %v304, %v310
  %v314 = vld [vmem:[%s6] sm:$0xff]
  %v315 = vld [vmem:[%s6 + $0x8] sm:$0xff]
  %v316 = vld [vmem:[%s7] sm:$0x1]
  %v318 = vlaneseq
  %v319 = vshrl.u32 %v318, 7
  %v320 = vsub.s32 0, %v319
  %v321 = vrot.slane %v316, %v320
  %vm323 = vcmask 130048
  %v325 = vsel %vm323, %v312, 0
  %v328 = vsel %vm323, %v313, 0
  %330 = vmatprep.subr.mxu0 0.0
  %331 = vmatpush1.msra.mxu0 %v314
  %332 = vmatprep.subr.mxu0 0.0
  %333 = vmatpush1.msra.mxu0 %v315
  %334 = vmatprep.subr.mxu0 0.0
  %335 = vmatpush1.msra.mxu0 0.0
  %336 = vmatprep.subr.mxu0 0.0
  %337 = vmatpush1.msra.mxu0 0.0
  %338 = vmatprep.subr.mxu0 0.0
  %339 = vmatpush1.msra.mxu0 0.0
  %340 = vmatprep.subr.mxu0 0.0
  %341 = vmatpush1.msra.mxu0 0.0
  %342 = vmatprep.subr.mxu0 0.0
  %343 = vmatpush1.msra.mxu0 0.0
  %344 = vmatprep.subr.mxu0 0.0
  %345 = vmatpush1.msra.mxu0 0.0
  %346 = vmatprep.subr.mxu0 0.0
  %347 = vmatpush1.msra.mxu0 0.0
  %348 = vmatprep.subr.mxu0 0.0
  %349 = vmatpush1.msra.mxu0 0.0
  %350 = vmatprep.subr.mxu0 0.0
  %351 = vmatpush1.msra.mxu0 0.0
  %352 = vmatprep.subr.mxu0 0.0
  %353 = vmatpush1.msra.mxu0 0.0
  %354 = vmatprep.subr.mxu0 0.0
  %355 = vmatpush1.msra.mxu0 0.0
  %356 = vmatprep.subr.mxu0 0.0
  %357 = vmatpush1.msra.mxu0 0.0
  %358 = vmatprep.subr.mxu0 0.0
  %359 = vmatpush1.msra.mxu0 0.0
  %360 = vmatprep.subr.mxu0 0.0
  %361 = vmatpush1.msra.mxu0 0.0
  %362 = vmatprep.subr.mxu0 0.0
  %363 = vmatpush1.msra.mxu0 0.0
  %364 = vmatprep.subr.mxu0 0.0
  %365 = vmatpush1.msra.mxu0 0.0
  %366 = vmatprep.subr.mxu0 0.0
  %367 = vmatpush1.msra.mxu0 0.0
  %368 = vmatprep.subr.mxu0 0.0
  %369 = vmatpush1.msra.mxu0 0.0
  %370 = vmatprep.subr.mxu0 0.0
  %371 = vmatpush1.msra.mxu0 0.0
  %372 = vmatprep.subr.mxu0 0.0
  %373 = vmatpush1.msra.mxu0 0.0
  %374 = vmatprep.subr.mxu0 0.0
  %375 = vmatpush1.msra.mxu0 0.0
  %376 = vmatprep.subr.mxu0 0.0
  %377 = vmatpush1.msra.mxu0 0.0
  %378 = vmatprep.subr.mxu0 0.0
  %379 = vmatpush1.msra.mxu0 0.0
  %380 = vmatprep.subr.mxu0 0.0
  %381 = vmatpush1.msra.mxu0 0.0
  %382 = vmatprep.subr.mxu0 0.0
  %383 = vmatpush1.msra.mxu0 0.0
  %384 = vmatprep.subr.mxu0 0.0
  %385 = vmatpush1.msra.mxu0 0.0
  %386 = vmatprep.subr.mxu0 0.0
  %387 = vmatpush1.msra.mxu0 0.0
  %388 = vmatprep.subr.mxu0 0.0
  %389 = vmatpush1.msra.mxu0 0.0
  %390 = vmatprep.subr.mxu0 0.0
  %391 = vmatpush1.msra.mxu0 0.0
  %392 = vmatprep.subr.mxu0 0.0
  %393 = vmatpush1.msra.mxu0 0.0
  %394 = vmatprep.mubr.f32.mxu0 0.0
  %395 = vmatmul.mubr.f32.gmra.mrb[0].mxu0 %v325
  %v396 = vpop.f32.mrb[0].mxu0
  %v397 = vadd.f32 %v321, %v396
  %v398 = vpop.f32.mrb[0].mxu0
  %399 = vmatprep.mubr.f32.mxu0 0.0
  %400 = vmatmul.mubr.f32.gmra.mrb[0].mxu0 %v328
  %v401 = vpop.f32.mrb[0].mxu0
  %v402 = vadd.f32 %v321, %v401
  %v403 = vpop.f32.mrb[0].mxu0
  %404 = vdwg.mxu0
  %vm405 = vcmask 23552
  %v406 = vsel %vm405, %v397, -inf
  %407 = vmax.xlane.f32.xlu0 %v406
  %v408 = vpop.xlane.xlu0 %407
  %v409 = vsel %vm405, %v402, -inf
  %410 = vmax.xlane.f32.xlu0 %v409
  %v411 = vpop.xlane.xlu0 %410
  %v412 = vsub.f32 %v397, %v408
  %v413 = vsub.f32 %v402, %v411
  %v414 = vmul.f32 %v412, 1.442695
  %v415 = vpow.pop %v414
  %v416 = vmul.f32 %v413, 1.442695
  %v417 = vpow.pop %v416
  %v418 = vsel %vm405, %v415, 0.0
  %419 = vadd.xlane.f32.xlu0 %v418
  %v420 = vpop.xlane.xlu0 %419
  %v421 = vsel %vm405, %v417, 0.0
  %422 = vadd.xlane.f32.xlu0 %v421
  %v423 = vpop.xlane.xlu0 %422
  %v424 = vrcp.pop %v420
  %v425 = vmul.f32 %v415, %v424
  %v426 = vrcp.pop %v423
  %v427 = vmul.f32 %v417, %v426
  %v430 = vcombine.high %v425, %v425
  %v432 = vunpack.c.l.s4 1983009808
  %v433 = vunpack.c.0.s8 %v432
  %v434 = vlaneseq
  %v435 = vshrl.u32 %v434, 7
  %v436 = vsub.s32 %v433, %v435
  %v437 = vrot.slane %v425, %v436
  %v439 = vunpack.c.l.s4 1983009808
  %v440 = vunpack.c.0.s8 %v439
  %v441 = vlaneseq
  %v442 = vshrl.u32 %v441, 7
  %v443 = vsub.s32 %v440, %v442
  %v444 = vrot.slane %v430, %v443
  %v445 = vcombine.high %v437, %v437
  %v446 = vcombine.high %v444, %v444
  %v447 = vcombine.high %v427, %v427
  %v449 = vunpack.c.l.s4 1983009808
  %v450 = vunpack.c.0.s8 %v449
  %v451 = vlaneseq
  %v452 = vshrl.u32 %v451, 7
  %v453 = vsub.s32 %v450, %v452
  %v454 = vrot.slane %v427, %v453
  %v456 = vunpack.c.l.s4 1983009808
  %v457 = vunpack.c.0.s8 %v456
  %v458 = vlaneseq
  %v459 = vshrl.u32 %v458, 7
  %v460 = vsub.s32 %v457, %v459
  %v461 = vrot.slane %v447, %v460
  %v462 = vcombine.high %v454, %v454
  %v463 = vcombine.high %v461, %v461
  %vm472 = vcmask 17408
  %473 = vst.msk [vmem:[%s8] sm:$0x3] %vm472, %v437
  %474 = vst.msk [vmem:[%s8 + $0x2] sm:$0x3] %vm472, %v445
  %475 = vst.msk [vmem:[%s8 + $0x4] sm:$0x3] %vm472, %v444
  %476 = vst.msk [vmem:[%s8 + $0x6] sm:$0x3] %vm472, %v446
  %477 = vst.msk [vmem:[%s8 + $0x8] sm:$0x3] %vm472, %v454
  %478 = vst.msk [vmem:[%s8 + $0xa] sm:$0x3] %vm472, %v462
  %479 = vst.msk [vmem:[%s8 + $0xc] sm:$0x3] %vm472, %v461
  %480 = vst.msk [vmem:[%s8 + $0xe] sm:$0x3] %vm472, %v463
  // Predicated region
  $region34: #{bi_lstm_forward.5} parent=0 // pred_check
    _
  $region35: #{bi_lstm_forward.5} parent=0 // pred_check_branch
    %482 = sbr.rel (0) target = $region37
  $region36: #{bi_lstm_forward.5} parent=0 // pred_region
    _
  $region37: #{bi_lstm_forward.5} parent=0 // pred_fallthru
    _
  // Predicated region
  $region38: #{bi_lstm_forward.5} parent=0 // pred_check
    _
  $region39: #{bi_lstm_forward.5} parent=0 // pred_check_branch
    %484 = sbr.rel (0) target = $region41
  $region40: #{bi_lstm_forward.5} parent=0 // pred_region
    _
  $region41: #{bi_lstm_forward.5} parent=0 // pred_fallthru
    _

// kernel: bi_lstm_forward.3
$region0: #{bi_lstm_forward.3}
  #allocation0 [shape = 'u32[]', space=smem, size = 0x4, offset = 0x4, fixed_abs, tag = 'smem constant byte address 0x4 - core index']
  #allocation1 [shape = 'u32[144,128]{1,0:T(1,128)}', space=vmem, size = 0x12000, scoped, tag = 'internal scratch']
  #allocation2 [shape = 'f32[8,2,128]{2,1,0:T(2,128)}', space=vmem, size = 0x2000, scoped, tag = 'scratch operand']
  %s0 = inlined_call_operand.vmem [shape: f32[2,8,2,32], index: 0, kind: input, shape index: {}]
  %s1 = inlined_call_operand.vmem [shape: f32[2,32,128], index: 1, kind: input, shape index: {}]
  %s2 = inlined_call_operand.vmem [shape: f32[2,32,128], index: 2, kind: input, shape index: {}]
  %s3 = inlined_call_operand.vmem [shape: f32[2,1,128], index: 3, kind: input, shape index: {}]
  %s4 = inlined_call_operand.vmem [shape: f32[2,2,32], index: 4, kind: input, shape index: {}]
  %s5 = inlined_call_operand.vmem [shape: f32[2,2,32], index: 5, kind: input, shape index: {}]
  %s6 = inlined_call_operand.vmem [shape: f32[2,8,2,32], index: 6, kind: output, shape index: {0}]
  %s7 = inlined_call_operand.vmem [shape: f32[2,2,32], index: 7, kind: output, shape index: {1}]
  %s8 = inlined_call_operand.vmem [shape: f32[2,2,32], index: 8, kind: output, shape index: {2}]
  %9 = xla_tuple %s6, %s7, %s8
  %s10 = sld [smem:[#allocation0]]
  $region73: #{bi_lstm_forward.3} parent=0
    _
  %s12 = ssub.s32 1, %s10
  %s13 = scalar_select 0, %s12, %s10
  loop: start=0, step=1, limit=4
  $region2: #{bi_lstm_forward.3} parent=0 // loop_pre_header
    _
  $region3: #{bi_lstm_forward.3} parent=0 // loop_header
    %s15 = sphi 0, %s19
    %p16 = scmp.ge.s32.totalorder %s15, 4
    %s25 = sphi 0, %s27
    %s28 = sphi 0, %s25
    %s29 = sphi 0, %s28
    %s45 = sphi 0, %s29
    %s51 = sphi 0, %s53
    %s54 = sphi 0, %s51
    %s55 = sphi 0, %s54
    %s71 = sphi 0, %s55
    %s77 = sphi 0, %s79
    %s80 = sphi 0, %s77
    %s81 = sphi 0, %s80
    %s97 = sphi 0, %s81
    %s103 = sphi 0, %s105
    %s106 = sphi 0, %s103
    %s107 = sphi 0, %s106
    %s123 = sphi 0, %s107
    %s129 = sphi 0, %s131
    %s132 = sphi 0, %s129
    %s133 = sphi 0, %s132
    %s149 = sphi 0, %s133
    %s155 = sphi 0, %s157
    %s158 = sphi 0, %s155
    %s159 = sphi 0, %s158
    %s175 = sphi 0, %s159
    %s181 = sphi 0, %s183
    %s184 = sphi 0, %s181
    %s185 = sphi 0, %s184
    %s201 = sphi 0, %s185
    %s207 = sphi 0, %s209
    %s210 = sphi 0, %s207
    %s211 = sphi 0, %s210
    %s227 = sphi 0, %s211
    %s233 = sphi 0, %s235
    %s236 = sphi 0, %s233
    %s237 = sphi 0, %s236
    %s253 = sphi 0, %s237
  $region4: #{bi_lstm_forward.3} parent=0 // loop_header_branch
    %18 = sbr.rel (%p16) target = $region8
  $region5: #{bi_lstm_forward.3} parent=0 // loop_body
    %s20 = ssub.s32 %s15, 1
    %s21 = ssub.s32 %s15, 2
    %s22 = sadd.s32 %s15, 1
    %s23 = ssub.s32 %s15, %s22
    %p24 = scmp.eq.s32.totalorder %s23, 0
    %s26 = sadd.s32 %s25, 1
    %s27 = scalar_select %p24, %s25, %s26
    %p30 = pneg %p24
    %p31 = scmp.eq.s32.totalorder %s15, 1
    %p32 = por %p30, %p31
    %p33 = scmp.ne.s32.totalorder %s25, %s28
    %p34 = scmp.eq.s32.totalorder %s15, 0
    %p35 = por %p33, %p34
    %p36 = scmp.ne.s32.totalorder %s25, %s28
    %p37 = scmp.eq.s32.totalorder %s20, 1
    %p38 = por %p36, %p37
    %p39 = scmp.ne.s32.totalorder %s28, %s29
    %p40 = scmp.eq.s32.totalorder %s20, 0
    %p41 = por %p39, %p40
    %p42 = scmp.ne.s32.totalorder %s28, %s29
    %p43 = scmp.eq.s32.totalorder %s21, 1
    %p44 = por %p42, %p43
    %p46 = scmp.ne.s32.totalorder %s29, %s45
    %p47 = scmp.eq.s32.totalorder %s21, 0
    %p48 = por %p46, %p47
    %s49 = ssub.s32 %s15, %s22
    %p50 = scmp.eq.s32.totalorder %s49, 0
    %s52 = sadd.s32 %s51, 1
    %s53 = scalar_select %p50, %s51, %s52
    %p56 = pneg %p50
    %p57 = scmp.eq.s32.totalorder %s15, 1
    %p58 = por %p56, %p57
    %p59 = scmp.ne.s32.totalorder %s51, %s54
    %p60 = scmp.eq.s32.totalorder %s15, 0
    %p61 = por %p59, %p60
    %p62 = scmp.ne.s32.totalorder %s51, %s54
    %p63 = scmp.eq.s32.totalorder %s20, 1
    %p64 = por %p62, %p63
    %p65 = scmp.ne.s32.totalorder %s54, %s55
    %p66 = scmp.eq.s32.totalorder %s20, 0
    %p67 = por %p65, %p66
    %p68 = scmp.ne.s32.totalorder %s54, %s55
    %p69 = scmp.eq.s32.totalorder %s21, 1
    %p70 = por %p68, %p69
    %p72 = scmp.ne.s32.totalorder %s55, %s71
    %p73 = scmp.eq.s32.totalorder %s21, 0
    %p74 = por %p72, %p73
    %s75 = ssub.s32 %s15, %s22
    %p76 = scmp.eq.s32.totalorder %s75, 0
    %s78 = sadd.s32 %s77, 1
    %s79 = scalar_select %p76, %s77, %s78
    %p82 = pneg %p76
    %p83 = scmp.eq.s32.totalorder %s15, 1
    %p84 = por %p82, %p83
    %p85 = scmp.ne.s32.totalorder %s77, %s80
    %p86 = scmp.eq.s32.totalorder %s15, 0
    %p87 = por %p85, %p86
    %p88 = scmp.ne.s32.totalorder %s77, %s80
    %p89 = scmp.eq.s32.totalorder %s20, 1
    %p90 = por %p88, %p89
    %p91 = scmp.ne.s32.totalorder %s80, %s81
    %p92 = scmp.eq.s32.totalorder %s20, 0
    %p93 = por %p91, %p92
    %p94 = scmp.ne.s32.totalorder %s80, %s81
    %p95 = scmp.eq.s32.totalorder %s21, 1
    %p96 = por %p94, %p95
    %p98 = scmp.ne.s32.totalorder %s81, %s97
    %p99 = scmp.eq.s32.totalorder %s21, 0
    %p100 = por %p98, %p99
    %s101 = ssub.s32 %s15, %s22
    %p102 = scmp.eq.s32.totalorder %s101, 0
    %s104 = sadd.s32 %s103, 1
    %s105 = scalar_select %p102, %s103, %s104
    %p108 = pneg %p102
    %p109 = scmp.eq.s32.totalorder %s15, 1
    %p110 = por %p108, %p109
    %p111 = scmp.ne.s32.totalorder %s103, %s106
    %p112 = scmp.eq.s32.totalorder %s15, 0
    %p113 = por %p111, %p112
    %p114 = scmp.ne.s32.totalorder %s103, %s106
    %p115 = scmp.eq.s32.totalorder %s20, 1
    %p116 = por %p114, %p115
    %p117 = scmp.ne.s32.totalorder %s106, %s107
    %p118 = scmp.eq.s32.totalorder %s20, 0
    %p119 = por %p117, %p118
    %p120 = scmp.ne.s32.totalorder %s106, %s107
    %p121 = scmp.eq.s32.totalorder %s21, 1
    %p122 = por %p120, %p121
    %p124 = scmp.ne.s32.totalorder %s107, %s123
    %p125 = scmp.eq.s32.totalorder %s21, 0
    %p126 = por %p124, %p125
    %s127 = ssub.s32 %s15, %s22
    %p128 = scmp.eq.s32.totalorder %s127, 0
    %s130 = sadd.s32 %s129, 1
    %s131 = scalar_select %p128, %s129, %s130
    %p134 = pneg %p128
    %p135 = scmp.eq.s32.totalorder %s15, 1
    %p136 = por %p134, %p135
    %p137 = scmp.ne.s32.totalorder %s129, %s132
    %p138 = scmp.eq.s32.totalorder %s15, 0
    %p139 = por %p137, %p138
    %p140 = scmp.ne.s32.totalorder %s129, %s132
    %p141 = scmp.eq.s32.totalorder %s20, 1
    %p142 = por %p140, %p141
    %p143 = scmp.ne.s32.totalorder %s132, %s133
    %p144 = scmp.eq.s32.totalorder %s20, 0
    %p145 = por %p143, %p144
    %p146 = scmp.ne.s32.totalorder %s132, %s133
    %p147 = scmp.eq.s32.totalorder %s21, 1
    %p148 = por %p146, %p147
    %p150 = scmp.ne.s32.totalorder %s133, %s149
    %p151 = scmp.eq.s32.totalorder %s21, 0
    %p152 = por %p150, %p151
    %s153 = ssub.s32 %s15, %s22
    %p154 = scmp.eq.s32.totalorder %s153, 0
    %s156 = sadd.s32 %s155, 1
    %s157 = scalar_select %p154, %s155, %s156
    %p160 = pneg %p154
    %p161 = scmp.eq.s32.totalorder %s15, 1
    %p162 = por %p160, %p161
    %p163 = scmp.ne.s32.totalorder %s155, %s158
    %p164 = scmp.eq.s32.totalorder %s15, 0
    %p165 = por %p163, %p164
    %p166 = scmp.ne.s32.totalorder %s155, %s158
    %p167 = scmp.eq.s32.totalorder %s20, 1
    %p168 = por %p166, %p167
    %p169 = scmp.ne.s32.totalorder %s158, %s159
    %p170 = scmp.eq.s32.totalorder %s20, 0
    %p171 = por %p169, %p170
    %p172 = scmp.ne.s32.totalorder %s158, %s159
    %p173 = scmp.eq.s32.totalorder %s21, 1
    %p174 = por %p172, %p173
    %p176 = scmp.ne.s32.totalorder %s159, %s175
    %p177 = scmp.eq.s32.totalorder %s21, 0
    %p178 = por %p176, %p177
    %s179 = ssub.s32 %s15, %s22
    %p180 = scmp.eq.s32.totalorder %s179, 0
    %s182 = sadd.s32 %s181, 1
    %s183 = scalar_select %p180, %s181, %s182
    %p186 = pneg %p180
    %p187 = scmp.eq.s32.totalorder %s15, 1
    %p188 = por %p186, %p187
    %p189 = scmp.ne.s32.totalorder %s181, %s184
    %p190 = scmp.eq.s32.totalorder %s15, 0
    %p191 = por %p189, %p190
    %p192 = scmp.ne.s32.totalorder %s181, %s184
    %p193 = scmp.eq.s32.totalorder %s20, 1
    %p194 = por %p192, %p193
    %p195 = scmp.ne.s32.totalorder %s184, %s185
    %p196 = scmp.eq.s32.totalorder %s20, 0
    %p197 = por %p195, %p196
    %p198 = scmp.ne.s32.totalorder %s184, %s185
    %p199 = scmp.eq.s32.totalorder %s21, 1
    %p200 = por %p198, %p199
    %p202 = scmp.ne.s32.totalorder %s185, %s201
    %p203 = scmp.eq.s32.totalorder %s21, 0
    %p204 = por %p202, %p203
    %s205 = ssub.s32 %s15, %s22
    %p206 = scmp.eq.s32.totalorder %s205, 0
    %s208 = sadd.s32 %s207, 1
    %s209 = scalar_select %p206, %s207, %s208
    %p212 = pneg %p206
    %p213 = scmp.eq.s32.totalorder %s15, 1
    %p214 = por %p212, %p213
    %p215 = scmp.ne.s32.totalorder %s207, %s210
    %p216 = scmp.eq.s32.totalorder %s15, 0
    %p217 = por %p215, %p216
    %p218 = scmp.ne.s32.totalorder %s207, %s210
    %p219 = scmp.eq.s32.totalorder %s20, 1
    %p220 = por %p218, %p219
    %p221 = scmp.ne.s32.totalorder %s210, %s211
    %p222 = scmp.eq.s32.totalorder %s20, 0
    %p223 = por %p221, %p222
    %p224 = scmp.ne.s32.totalorder %s210, %s211
    %p225 = scmp.eq.s32.totalorder %s21, 1
    %p226 = por %p224, %p225
    %p228 = scmp.ne.s32.totalorder %s211, %s227
    %p229 = scmp.eq.s32.totalorder %s21, 0
    %p230 = por %p228, %p229
    %s231 = ssub.s32 %s15, %s22
    %p232 = scmp.eq.s32.totalorder %s231, 0
    %s234 = sadd.s32 %s233, 1
    %s235 = scalar_select %p232, %s233, %s234
    %p238 = pneg %p232
    %p239 = scmp.eq.s32.totalorder %s15, 1
    %p240 = por %p238, %p239
    %p241 = scmp.ne.s32.totalorder %s233, %s236
    %p242 = scmp.eq.s32.totalorder %s15, 0
    %p243 = por %p241, %p242
    %p244 = scmp.ne.s32.totalorder %s233, %s236
    %p245 = scmp.eq.s32.totalorder %s20, 1
    %p246 = por %p244, %p245
    %p247 = scmp.ne.s32.totalorder %s236, %s237
    %p248 = scmp.eq.s32.totalorder %s20, 0
    %p249 = por %p247, %p248
    %p250 = scmp.ne.s32.totalorder %s236, %s237
    %p251 = scmp.eq.s32.totalorder %s21, 1
    %p252 = por %p250, %p251
    %p254 = scmp.ne.s32.totalorder %s237, %s253
    %p255 = scmp.eq.s32.totalorder %s21, 0
    %p256 = por %p254, %p255
    %p257 = scmp.le.s32.totalorder 1, %s15
    %p258 = scmp.lt.s32.totalorder %s15, 3
    %p259 = pnand %p257, %p258
    %p260 = pneg %p259
    // Predicated region
    $region9: #{bi_lstm_forward.3} parent=5 // pred_check
      _
    $region10: #{bi_lstm_forward.3} parent=5 // pred_check_branch
      %262 = sbr.rel (%p259) target = $region12
    $region11: #{bi_lstm_forward.3} parent=5 // pred_region
      %s263 = ssub.s32 %s15, 1
    $region12: #{bi_lstm_forward.3} parent=5 // pred_fallthru
      _
    %p264 = scmp.lt.s32.totalorder %s15, 2
    // Predicated region
    $region13: #{bi_lstm_forward.3} parent=5 // pred_check
      %p265 = pneg %p264
    $region14: #{bi_lstm_forward.3} parent=5 // pred_check_branch
      %267 = sbr.rel (%p265) target = $region16
    $region15: #{bi_lstm_forward.3} parent=5 // pred_region
      // Predicated region
      $region17: #{bi_lstm_forward.3} parent=15 // pred_check
        %p268 = pneg %p35
      $region18: #{bi_lstm_forward.3} parent=15 // pred_check_branch
        %270 = sbr.rel (%p268) target = $region20
      $region19: #{bi_lstm_forward.3} parent=15 // pred_region
        %p271 = scmp.lt.s32.totalorder %s15, 1
        %s272 = scalar_select %p271, %s15, 1
        %s273 = smul.addr %s272, 8
        %s274 = smul.addr %s273, 2
        %s275 = scalar_lea.vmem %s0, %s274
      $region20: #{bi_lstm_forward.3} parent=15 // pred_fallthru
        _
      // Predicated region
      $region21: #{bi_lstm_forward.3} parent=15 // pred_check
        %p276 = pneg %p61
      $region22: #{bi_lstm_forward.3} parent=15 // pred_check_branch
        %278 = sbr.rel (%p276) target = $region24
      $region23: #{bi_lstm_forward.3} parent=15 // pred_region
        %p279 = scmp.lt.s32.totalorder %s15, 1
        %s280 = scalar_select %p279, %s15, 1
        %s281 = smul.addr %s280, 4
        %s282 = smul.addr %s281, 8
        %s283 = scalar_lea.vmem %s1, %s282
      $region24: #{bi_lstm_forward.3} parent=15 // pred_fallthru
        _
      // Predicated region
      $region25: #{bi_lstm_forward.3} parent=15 // pred_check
        %p284 = pneg %p87
      $region26: #{bi_lstm_forward.3} parent=15 // pred_check_branch
        %286 = sbr.rel (%p284) target = $region28
      $region27: #{bi_lstm_forward.3} parent=15 // pred_region
        %p287 = scmp.lt.s32.totalorder %s15, 1
        %s288 = scalar_select %p287, %s15, 1
        %s289 = smul.addr %s288, 4
        %s290 = smul.addr %s289, 8
        %s291 = scalar_lea.vmem %s2, %s290
      $region28: #{bi_lstm_forward.3} parent=15 // pred_fallthru
        _
      // Predicated region
      $region29: #{bi_lstm_forward.3} parent=15 // pred_check
        %p292 = pneg %p113
      $region30: #{bi_lstm_forward.3} parent=15 // pred_check_branch
        %294 = sbr.rel (%p292) target = $region32
      $region31: #{bi_lstm_forward.3} parent=15 // pred_region
        %p295 = scmp.lt.s32.totalorder %s15, 1
        %s296 = scalar_select %p295, %s15, 1
        %s297 = scalar_lea.vmem %s3, %s296
      $region32: #{bi_lstm_forward.3} parent=15 // pred_fallthru
        _
      // Predicated region
      $region33: #{bi_lstm_forward.3} parent=15 // pred_check
        %p298 = pneg %p139
      $region34: #{bi_lstm_forward.3} parent=15 // pred_check_branch
        %300 = sbr.rel (%p298) target = $region36
      $region35: #{bi_lstm_forward.3} parent=15 // pred_region
        %p301 = scmp.lt.s32.totalorder %s15, 1
        %s302 = scalar_select %p301, %s15, 1
        %s303 = smul.addr %s302, 2
        %s304 = scalar_lea.vmem %s4, %s303
      $region36: #{bi_lstm_forward.3} parent=15 // pred_fallthru
        _
      // Predicated region
      $region37: #{bi_lstm_forward.3} parent=15 // pred_check
        %p305 = pneg %p165
      $region38: #{bi_lstm_forward.3} parent=15 // pred_check_branch
        %307 = sbr.rel (%p305) target = $region40
      $region39: #{bi_lstm_forward.3} parent=15 // pred_region
        %p308 = scmp.lt.s32.totalorder %s15, 1
        %s309 = scalar_select %p308, %s15, 1
        %s310 = smul.addr %s309, 2
        %s311 = scalar_lea.vmem %s5, %s310
      $region40: #{bi_lstm_forward.3} parent=15 // pred_fallthru
        _
    $region16: #{bi_lstm_forward.3} parent=5 // pred_fallthru
      _
    %p312 = scmp.le.s32.totalorder 1, %s15
    %p313 = scmp.lt.s32.totalorder %s15, 3
    %p314 = pnand %p312, %p313
    %p315 = pneg %p314
    // Predicated region
    $region41: #{bi_lstm_forward.3} parent=5 // pred_check
      _
    $region42: #{bi_lstm_forward.3} parent=5 // pred_check_branch
      %317 = sbr.rel (%p314) target = $region44
    $region43: #{bi_lstm_forward.3} parent=5 // pred_region
      %s318 = ssub.s32 %s15, 1
      %p319 = scmp.lt.s32.totalorder %s20, 1
      %s320 = scalar_select %p319, %s20, 1
      %s321 = smul.addr %s320, 8
      %s322 = smul.addr %s321, 2
      %s323 = scalar_lea.vmem %s0, %s322
      %p324 = pneg %p41
      %p325 = pneg %p38
      %p326 = scmp.lt.s32.totalorder %s20, 1
      %s327 = scalar_select %p326, %s20, 1
      %s328 = smul.addr %s327, 4
      %s329 = smul.addr %s328, 8
      %s330 = scalar_lea.vmem %s1, %s329
      %p331 = pneg %p67
      %p332 = pneg %p64
      %p333 = scmp.lt.s32.totalorder %s20, 1
      %s334 = scalar_select %p333, %s20, 1
      %s335 = smul.addr %s334, 4
      %s336 = smul.addr %s335, 8
      %s337 = scalar_lea.vmem %s2, %s336
      %p338 = pneg %p93
      %p339 = pneg %p90
      %p340 = scmp.lt.s32.totalorder %s20, 1
      %s341 = scalar_select %p340, %s20, 1
      %s342 = scalar_lea.vmem %s3, %s341
      %p343 = pneg %p119
      %p344 = pneg %p116
      %p345 = scmp.lt.s32.totalorder %s20, 1
      %s346 = scalar_select %p345, %s20, 1
      %s347 = smul.addr %s346, 2
      %s348 = scalar_lea.vmem %s4, %s347
      %p349 = pneg %p145
      %p350 = pneg %p142
      %p351 = scmp.lt.s32.totalorder %s20, 1
      %s352 = scalar_select %p351, %s20, 1
      %s353 = smul.addr %s352, 2
      %s354 = scalar_lea.vmem %s5, %s353
      %p355 = pneg %p171
      %p356 = pneg %p168
      %p357 = pneg %p197
      %p358 = pneg %p194
      %p359 = scmp.lt.s32.totalorder %s20, 1
      %s360 = scalar_select %p359, %s20, 1
      %s361 = smul.addr %s360, 8
      %s362 = smul.addr %s361, 2
      %s363 = scalar_lea.vmem %s6, %s362
      %p364 = pneg %p223
      %p365 = pneg %p220
      %p366 = scmp.lt.s32.totalorder %s20, 1
      %s367 = scalar_select %p366, %s20, 1
      %s368 = smul.addr %s367, 2
      %s369 = scalar_lea.vmem %s7, %s368
      %p370 = pneg %p249
      %p371 = pneg %p246
      %p372 = scmp.lt.s32.totalorder %s20, 1
      %s373 = scalar_select %p372, %s20, 1
      %s374 = smul.addr %s373, 2
      %s375 = scalar_lea.vmem %s8, %s374
      %p376 = scmp.lt.s32.totalorder %s20, 1
      %s377 = scalar_select %p376, %s20, 1
      %s378 = smul.addr %s377, 8
      %s379 = smul.addr %s378, 2
      %s380 = scalar_lea.vmem %s0, %s379
      %p381 = scmp.lt.s32.totalorder %s20, 1
      %s382 = scalar_select %p381, %s20, 1
      %s383 = smul.addr %s382, 4
      %s384 = smul.addr %s383, 8
      %s385 = scalar_lea.vmem %s1, %s384
      %p386 = scmp.lt.s32.totalorder %s20, 1
      %s387 = scalar_select %p386, %s20, 1
      %s388 = smul.addr %s387, 4
      %s389 = smul.addr %s388, 8
      %s390 = scalar_lea.vmem %s2, %s389
      %p391 = scmp.lt.s32.totalorder %s20, 1
      %s392 = scalar_select %p391, %s20, 1
      %s393 = scalar_lea.vmem %s3, %s392
      %p394 = scmp.lt.s32.totalorder %s20, 1
      %s395 = scalar_select %p394, %s20, 1
      %s396 = smul.addr %s395, 2
      %s397 = scalar_lea.vmem %s4, %s396
      %p398 = scmp.lt.s32.totalorder %s20, 1
      %s399 = scalar_select %p398, %s20, 1
      %s400 = smul.addr %s399, 2
      %s401 = scalar_lea.vmem %s5, %s400
      %p402 = scmp.lt.s32.totalorder %s20, 1
      %s403 = scalar_select %p402, %s20, 1
      %s404 = smul.addr %s403, 8
      %s405 = smul.addr %s404, 2
      %s406 = scalar_lea.vmem %s6, %s405
      %p407 = scmp.lt.s32.totalorder %s20, 1
      %s408 = scalar_select %p407, %s20, 1
      %s409 = smul.addr %s408, 2
      %s410 = scalar_lea.vmem %s7, %s409
      %p411 = scmp.lt.s32.totalorder %s20, 1
      %s412 = scalar_select %p411, %s20, 1
      %s413 = smul.addr %s412, 2
      %s414 = scalar_lea.vmem %s8, %s413
      %v415 = vld [vmem:[%s380] sm:$0x3]
      %v416 = vld [vmem:[%s380 + $0x2] sm:$0x3]
      %v417 = vld [vmem:[%s380 + $0x4] sm:$0x3]
      %v418 = vld [vmem:[%s380 + $0x6] sm:$0x3]
      %v419 = vld [vmem:[%s380 + $0x8] sm:$0x3]
      %v420 = vld [vmem:[%s380 + $0xa] sm:$0x3]
      %v421 = vld [vmem:[%s380 + $0xc] sm:$0x3]
      %v422 = vld [vmem:[%s380 + $0xe] sm:$0x3]
      %v423 = vld [vmem:[%s385] sm:$0xff]
      %v424 = vld [vmem:[%s385 + $0x8] sm:$0xff]
      %v425 = vld [vmem:[%s385 + $0x10] sm:$0xff]
      %v426 = vld [vmem:[%s385 + $0x18] sm:$0xff]
      %v427 = vld [vmem:[%s393] sm:$0x1]
      %v429 = vlaneseq
      %v430 = vshrl.u32 %v429, 7
      %v431 = vsub.s32 0, %v430
      %v432 = vrot.slane %v427, %v431
      %v442 = vcombine.low %v415, %v416
      %v443 = vcombine.low %v417, %v418
      %v445 = vunpack.c.l.s4 1983009808
      %v446 = vunpack.c.0.s8 %v445
      %v447 = vlaneseq
      %v448 = vshrl.u32 %v447, 7
      %v449 = vsub.s32 %v446, %v448
      %v450 = vrot.slane %v442, %v449
      %v452 = vunpack.c.l.s4 1983009808
      %v453 = vunpack.c.0.s8 %v452
      %v454 = vlaneseq
      %v455 = vshrl.u32 %v454, 7
      %v456 = vsub.s32 %v453, %v455
      %v457 = vrot.slane %v443, %v456
      %v458 = vcombine.low %v450, %v457
      %v459 = vcombine.low %v419, %v420
      %v460 = vcombine.low %v421, %v422
      %v462 = vunpack.c.l.s4 1983009808
      %v463 = vunpack.c.0.s8 %v462
      %v464 = vlaneseq
      %v465 = vshrl.u32 %v464, 7
      %v466 = vsub.s32 %v463, %v465
      %v467 = vrot.slane %v459, %v466
      %v469 = vunpack.c.l.s4 1983009808
      %v470 = vunpack.c.0.s8 %v469
      %v471 = vlaneseq
      %v472 = vshrl.u32 %v471, 7
      %v473 = vsub.s32 %v470, %v472
      %v474 = vrot.slane %v460, %v473
      %v475 = vcombine.low %v467, %v474
      %vm476 = vcmask 261120
      %v477 = vsel %vm476, %v458, 0
      %v479 = vsel %vm476, %v475, 0
      %481 = vmatprep.subr.mxu0 0.0
      %482 = vmatpush1.msra.mxu0 %v423
      %483 = vmatprep.subr.mxu0 0.0
      %484 = vmatpush1.msra.mxu0 %v424
      %485 = vmatprep.subr.mxu0 0.0
      %486 = vmatpush1.msra.mxu0 %v425
      %487 = vmatprep.subr.mxu0 0.0
      %488 = vmatpush1.msra.mxu0 %v426
      %489 = vmatprep.subr.mxu0 0.0
      %490 = vmatpush1.msra.mxu0 0.0
      %491 = vmatprep.subr.mxu0 0.0
      %492 = vmatpush1.msra.mxu0 0.0
      %493 = vmatprep.subr.mxu0 0.0
      %494 = vmatpush1.msra.mxu0 0.0
      %495 = vmatprep.subr.mxu0 0.0
      %496 = vmatpush1.msra.mxu0 0.0
      %497 = vmatprep.subr.mxu0 0.0
      %498 = vmatpush1.msra.mxu0 0.0
      %499 = vmatprep.subr.mxu0 0.0
      %500 = vmatpush1.msra.mxu0 0.0
      %501 = vmatprep.subr.mxu0 0.0
      %502 = vmatpush1.msra.mxu0 0.0
      %503 = vmatprep.subr.mxu0 0.0
      %504 = vmatpush1.msra.mxu0 0.0
      %505 = vmatprep.subr.mxu0 0.0
      %506 = vmatpush1.msra.mxu0 0.0
      %507 = vmatprep.subr.mxu0 0.0
      %508 = vmatpush1.msra.mxu0 0.0
      %509 = vmatprep.subr.mxu0 0.0
      %510 = vmatpush1.msra.mxu0 0.0
      %511 = vmatprep.subr.mxu0 0.0
      %512 = vmatpush1.msra.mxu0 0.0
      %513 = vmatprep.subr.mxu0 0.0
      %514 = vmatpush1.msra.mxu0 0.0
      %515 = vmatprep.subr.mxu0 0.0
      %516 = vmatpush1.msra.mxu0 0.0
      %517 = vmatprep.subr.mxu0 0.0
      %518 = vmatpush1.msra.mxu0 0.0
      %519 = vmatprep.subr.mxu0 0.0
      %520 = vmatpush1.msra.mxu0 0.0
      %521 = vmatprep.subr.mxu0 0.0
      %522 = vmatpush1.msra.mxu0 0.0
      %523 = vmatprep.subr.mxu0 0.0
      %524 = vmatpush1.msra.mxu0 0.0
      %525 = vmatprep.subr.mxu0 0.0
      %526 = vmatpush1.msra.mxu0 0.0
      %527 = vmatprep.subr.mxu0 0.0
      %528 = vmatpush1.msra.mxu0 0.0
      %529 = vmatprep.subr.mxu0 0.0
      %530 = vmatpush1.msra.mxu0 0.0
      %531 = vmatprep.subr.mxu0 0.0
      %532 = vmatpush1.msra.mxu0 0.0
      %533 = vmatprep.subr.mxu0 0.0
      %534 = vmatpush1.msra.mxu0 0.0
      %535 = vmatprep.subr.mxu0 0.0
      %536 = vmatpush1.msra.mxu0 0.0
      %537 = vmatprep.subr.mxu0 0.0
      %538 = vmatpush1.msra.mxu0 0.0
      %539 = vmatprep.subr.mxu0 0.0
      %540 = vmatpush1.msra.mxu0 0.0
      %541 = vmatprep.subr.mxu0 0.0
      %542 = vmatpush1.msra.mxu0 0.0
      %543 = vmatprep.subr.mxu0 0.0
      %544 = vmatpush1.msra.mxu0 0.0
      %545 = vmatprep.mubr.f32.mxu0 0.0
      %546 = vmatmul.mubr.f32.gmra.mrb[0].mxu0 %v477
      %v547 = vpop.f32.mrb[0].mxu0
      %v548 = vadd.f32 %v432, %v547
      %v549 = vpop.f32.mrb[0].mxu0
      %550 = vmatprep.mubr.f32.mxu0 0.0
      %551 = vmatmul.mubr.f32.gmra.mrb[0].mxu0 %v479
      %v552 = vpop.f32.mrb[0].mxu0
      %v553 = vadd.f32 %v432, %v552
      %v554 = vpop.f32.mrb[0].mxu0
      %555 = vdwg.mxu0
      %v558 = vcombine.high %v548, %v548
      %v560 = vunpack.c.l.s4 1983009808
      %v561 = vunpack.c.0.s8 %v560
      %v562 = vlaneseq
      %v563 = vshrl.u32 %v562, 7
      %v564 = vsub.s32 %v561, %v563
      %v565 = vrot.slane %v548, %v564
      %v567 = vunpack.c.l.s4 1983009808
      %v568 = vunpack.c.0.s8 %v567
      %v569 = vlaneseq
      %v570 = vshrl.u32 %v569, 7
      %v571 = vsub.s32 %v568, %v570
      %v572 = vrot.slane %v558, %v571
      %v573 = vcombine.high %v565, %v565
      %v574 = vcombine.high %v572, %v572
      %v575 = vcombine.high %v553, %v553
      %v577 = vunpack.c.l.s4 1983009808
      %v578 = vunpack.c.0.s8 %v577
      %v579 = vlaneseq
      %v580 = vshrl.u32 %v579, 7
      %v581 = vsub.s32 %v578, %v580
      %v582 = vrot.slane %v553, %v581
      %v584 = vunpack.c.l.s4 1983009808
      %v585 = vunpack.c.0.s8 %v584
      %v586 = vlaneseq
      %v587 = vshrl.u32 %v586, 7
      %v588 = vsub.s32 %v585, %v587
      %v589 = vrot.slane %v575, %v588
      %v590 = vcombine.high %v582, %v582
      %v591 = vcombine.high %v589, %v589
      %600 = vst [vmem:[#allocation2] sm:$0x3] %v565
      %601 = vst [vmem:[#allocation2 + $0x2] sm:$0x3] %v573
      %602 = vst [vmem:[#allocation2 + $0x4] sm:$0x3] %v572
      %603 = vst [vmem:[#allocation2 + $0x6] sm:$0x3] %v574
      %604 = vst [vmem:[#allocation2 + $0x8] sm:$0x3] %v582
      %605 = vst [vmem:[#allocation2 + $0xa] sm:$0x3] %v590
      %606 = vst [vmem:[#allocation2 + $0xc] sm:$0x3] %v589
      %607 = vst [vmem:[#allocation2 + $0xe] sm:$0x3] %v591
      %v608 = vld [vmem:[%s390] sm:$0xff]
      %v609 = vld [vmem:[%s390 + $0x8] sm:$0xff]
      %v610 = vld [vmem:[%s390 + $0x10] sm:$0xff]
      %v611 = vld [vmem:[%s390 + $0x18] sm:$0xff]
      %v612 = vld [vmem:[%s397] sm:$0x3]
      %v613 = vld [vmem:[%s401] sm:$0x3]
      %v614 = vld [vmem:[#allocation2] sm:$0x3]
      %v616 = vsel %vm476, %v612, 0
      %618 = vmatprep.subr.mxu0 0.0
      %619 = vmatpush1.msra.mxu0 %v608
      %620 = vmatprep.subr.mxu0 0.0
      %621 = vmatpush1.msra.mxu0 %v609
      %622 = vmatprep.subr.mxu0 0.0
      %623 = vmatpush1.msra.mxu0 %v610
      %624 = vmatprep.subr.mxu0 0.0
      %625 = vmatpush1.msra.mxu0 %v611
      %626 = vmatprep.subr.mxu0 0.0
      %627 = vmatpush1.msra.mxu0 0.0
      %628 = vmatprep.subr.mxu0 0.0
      %629 = vmatpush1.msra.mxu0 0.0
      %630 = vmatprep.subr.mxu0 0.0
      %631 = vmatpush1.msra.mxu0 0.0
      %632 = vmatprep.subr.mxu0 0.0
      %633 = vmatpush1.msra.mxu0 0.0
      %634 = vmatprep.subr.mxu0 0.0
      %635 = vmatpush1.msra.mxu0 0.0
      %636 = vmatprep.subr.mxu0 0.0
      %637 = vmatpush1.msra.mxu0 0.0
      %638 = vmatprep.subr.mxu0 0.0
      %639 = vmatpush1.msra.mxu0 0.0
      %640 = vmatprep.subr.mxu0 0.0
      %641 = vmatpush1.msra.mxu0 0.0
      %642 = vmatprep.subr.mxu0 0.0
      %643 = vmatpush1.msra.mxu0 0.0
      %644 = vmatprep.subr.mxu0 0.0
      %645 = vmatpush1.msra.mxu0 0.0
      %646 = vmatprep.subr.mxu0 0.0
      %647 = vmatpush1.msra.mxu0 0.0
      %648 = vmatprep.subr.mxu0 0.0
      %649 = vmatpush1.msra.mxu0 0.0
      %650 = vmatprep.subr.mxu0 0.0
      %651 = vmatpush1.msra.mxu0 0.0
      %652 = vmatprep.subr.mxu0 0.0
      %653 = vmatpush1.msra.mxu0 0.0
      %654 = vmatprep.subr.mxu0 0.0
      %655 = vmatpush1.msra.mxu0 0.0
      %656 = vmatprep.subr.mxu0 0.0
      %657 = vmatpush1.msra.mxu0 0.0
      %658 = vmatprep.subr.mxu0 0.0
      %659 = vmatpush1.msra.mxu0 0.0
      %660 = vmatprep.subr.mxu0 0.0
      %661 = vmatpush1.msra.mxu0 0.0
      %662 = vmatprep.subr.mxu0 0.0
      %663 = vmatpush1.msra.mxu0 0.0
      %664 = vmatprep.subr.mxu0 0.0
      %665 = vmatpush1.msra.mxu0 0.0
      %666 = vmatprep.subr.mxu0 0.0
      %667 = vmatpush1.msra.mxu0 0.0
      %668 = vmatprep.subr.mxu0 0.0
      %669 = vmatpush1.msra.mxu0 0.0
      %670 = vmatprep.subr.mxu0 0.0
      %671 = vmatpush1.msra.mxu0 0.0
      %672 = vmatprep.subr.mxu0 0.0
      %673 = vmatpush1.msra.mxu0 0.0
      %674 = vmatprep.subr.mxu0 0.0
      %675 = vmatpush1.msra.mxu0 0.0
      %676 = vmatprep.subr.mxu0 0.0
      %677 = vmatpush1.msra.mxu0 0.0
      %678 = vmatprep.subr.mxu0 0.0
      %679 = vmatpush1.msra.mxu0 0.0
      %680 = vmatprep.subr.mxu0 0.0
      %681 = vmatpush1.msra.mxu0 0.0
      %682 = vmatprep.mubr.f32.mxu0 0.0
      %683 = vmatmul.mubr.f32.gmra.mrb[0].mxu0 %v616
      %v684 = vpop.f32.mrb[0].mxu0
      %v685 = vadd.f32 0.0, %v684
      %v686 = vpop.f32.mrb[0].mxu0
      %687 = vdwg.mxu0
      %v688 = vadd.f32 %v614, %v685
      %v689 = vxor.u32 %v688, 2147483648
      %v690 = vmul.f32 %v689, 1.442695
      %v691 = vpow.pop %v690
      %v692 = vadd.f32 %v691, 1.0
      %v693 = vrcp.pop %v692
      %v694 = vmul.f32 1.0, %v693
      %v695 = vtanh.pop %v688
      %697 = vrot.lane.b32.xlu0 %v613, 32
      %v698 = vpop.permute.xlu0 %697
      %v700 = vmul.f32 %v694, %v698
      %702 = vrot.lane.b32.xlu0 %v695, 64
      %v703 = vpop.permute.xlu0 %702
      %v705 = vmul.f32 %v694, %v703
      %707 = vrot.lane.b32.xlu0 %v705, 32
      %v708 = vpop.permute.xlu0 %707
      %v710 = vadd.f32 %v700, %v708
      %v711 = vtanh.pop %v710
      %713 = vrot.lane.b32.xlu0 %v711, 64
      %v714 = vpop.permute.xlu0 %713
      %v716 = vmul.f32 %v694, %v714
      %718 = vrot.lane.b32.xlu0 %v716, 32
      %v719 = vpop.permute.xlu0 %718
      %vm721 = vcmask 254976
      %722 = vst.msk [vmem:[%s406] sm:$0x3] %vm721, %v719
      %s723 = scalar_lea.vmem [#allocation2], 2
      %v724 = vld [vmem:[%s723] sm:$0x3]
      %v725 = vsel %vm476, %v719, 0
      %727 = vmatprep.subr.mxu0 0.0
      %728 = vmatpush1.msra.mxu0 %v608
      %729 = vmatprep.subr.mxu0 0.0
      %730 = vmatpush1.msra.mxu0 %v609
      %731 = vmatprep.subr.mxu0 0.0
      %732 = vmatpush1.msra.mxu0 %v610
      %733 = vmatprep.subr.mxu0 0.0
      %734 = vmatpush1.msra.mxu0 %v611
      %735 = vmatprep.subr.mxu0 0.0
      %736 = vmatpush1.msra.mxu0 0.0
      %737 = vmatprep.subr.mxu0 0.0
      %738 = vmatpush1.msra.mxu0 0.0
      %739 = vmatprep.subr.mxu0 0.0
      %740 = vmatpush1.msra.mxu0 0.0
      %741 = vmatprep.subr.mxu0 0.0
      %742 = vmatpush1.msra.mxu0 0.0
      %743 = vmatprep.subr.mxu0 0.0
      %744 = vmatpush1.msra.mxu0 0.0
      %745 = vmatprep.subr.mxu0 0.0
      %746 = vmatpush1.msra.mxu0 0.0
      %747 = vmatprep.subr.mxu0 0.0
      %748 = vmatpush1.msra.mxu0 0.0
      %749 = vmatprep.subr.mxu0 0.0
      %750 = vmatpush1.msra.mxu0 0.0
      %751 = vmatprep.subr.mxu0 0.0
      %752 = vmatpush1.msra.mxu0 0.0
      %753 = vmatprep.subr.mxu0 0.0
      %754 = vmatpush1.msra.mxu0 0.0
      %755 = vmatprep.subr.mxu0 0.0
      %756 = vmatpush1.msra.mxu0 0.0
      %757 = vmatprep.subr.mxu0 0.0
      %758 = vmatpush1.msra.mxu0 0.0
      %759 = vmatprep.subr.mxu0 0.0
      %760 = vmatpush1.msra.mxu0 0.0
      %761 = vmatprep.subr.mxu0 0.0
      %762 = vmatpush1.msra.mxu0 0.0
      %763 = vmatprep.subr.mxu0 0.0
      %764 = vmatpush1.msra.mxu0 0.0
      %765 = vmatprep.subr.mxu0 0.0
      %766 = vmatpush1.msra.mxu0 0.0
      %767 = vmatprep.subr.mxu0 0.0
      %768 = vmatpush1.msra.mxu0 0.0
      %769 = vmatprep.subr.mxu0 0.0
      %770 = vmatpush1.msra.mxu0 0.0
      %771 = vmatprep.subr.mxu0 0.0
      %772 = vmatpush1.msra.mxu0 0.0
      %773 = vmatprep.subr.mxu0 0.0
      %774 = vmatpush1.msra.mxu0 0.0
      %775 = vmatprep.subr.mxu0 0.0
      %776 = vmatpush1.msra.mxu0 0.0
      %777 = vmatprep.subr.mxu0 0.0
      %778 = vmatpush1.msra.mxu0 0.0
      %779 = vmatprep.subr.mxu0 0.0
      %780 = vmatpush1.msra.mxu0 0.0
      %781 = vmatprep.subr.mxu0 0.0
      %782 = vmatpush1.msra.mxu0 0.0
      %783 = vmatprep.subr.mxu0 0.0
      %784 = vmatpush1.msra.mxu0 0.0
      %785 = vmatprep.subr.mxu0 0.0
      %786 = vmatpush1.msra.mxu0 0.0
      %787 = vmatprep.subr.mxu0 0.0
      %788 = vmatpush1.msra.mxu0 0.0
      %789 = vmatprep.subr.mxu0 0.0
      %790 = vmatpush1.msra.mxu0 0.0
      %791 = vmatprep.mubr.f32.mxu0 0.0
      %792 = vmatmul.mubr.f32.gmra.mrb[0].mxu0 %v725
      %v793 = vpop.f32.mrb[0].mxu0
      %v794 = vadd.f32 0.0, %v793
      %v795 = vpop.f32.mrb[0].mxu0
      %796 = vdwg.mxu0
      %v797 = vadd.f32 %v724, %v794
      %v798 = vxor.u32 %v797, 2147483648
      %v799 = vmul.f32 %v798, 1.442695
      %v800 = vpow.pop %v799
      %v801 = vadd.f32 %v800, 1.0
      %v802 = vrcp.pop %v801
      %v803 = vmul.f32 1.0, %v802
      %v804 = vtanh.pop %v797
      %v805 = vmul.f32 %v803, %v710
      %807 = vrot.lane.b32.xlu0 %v804, 64
      %v808 = vpop.permute.xlu0 %807
      %v810 = vmul.f32 %v803, %v808
      %812 = vrot.lane.b32.xlu0 %v810, 32
      %v813 = vpop.permute.xlu0 %812
      %v815 = vadd.f32 %v805, %v813
      %v816 = vtanh.pop %v815
      %818 = vrot.lane.b32.xlu0 %v816, 64
      %v819 = vpop.permute.xlu0 %818
      %v821 = vmul.f32 %v803, %v819
      %823 = vrot.lane.b32.xlu0 %v821, 32
      %v824 = vpop.permute.xlu0 %823
      %s826 = scalar_lea.vmem %s406, 2
      %827 = vst.msk [vmem:[%s826] sm:$0x3] %vm721, %v824
      %s828 = scalar_lea.vmem [#allocation2], 4
      %v829 = vld [vmem:[%s828] sm:$0x3]
      %v830 = vsel %vm476, %v824, 0
      %832 = vmatprep.subr.mxu0 0.0
      %833 = vmatpush1.msra.mxu0 %v608
      %834 = vmatprep.subr.mxu0 0.0
      %835 = vmatpush1.msra.mxu0 %v609
      %836 = vmatprep.subr.mxu0 0.0
      %837 = vmatpush1.msra.mxu0 %v610
      %838 = vmatprep.subr.mxu0 0.0
      %839 = vmatpush1.msra.mxu0 %v611
      %840 = vmatprep.subr.mxu0 0.0
      %841 = vmatpush1.msra.mxu0 0.0
      %842 = vmatprep.subr.mxu0 0.0
      %843 = vmatpush1.msra.mxu0 0.0
      %844 = vmatprep.subr.mxu0 0.0
      %845 = vmatpush1.msra.mxu0 0.0
      %846 = vmatprep.subr.mxu0 0.0
      %847 = vmatpush1.msra.mxu0 0.0
      %848 = vmatprep.subr.mxu0 0.0
      %849 = vmatpush1.msra.mxu0 0.0
      %850 = vmatprep.subr.mxu0 0.0
      %851 = vmatpush1.msra.mxu0 0.0
      %852 = vmatprep.subr.mxu0 0.0
      %853 = vmatpush1.msra.mxu0 0.0
      %854 = vmatprep.subr.mxu0 0.0
      %855 = vmatpush1.msra.mxu0 0.0
      %856 = vmatprep.subr.mxu0 0.0
      %857 = vmatpush1.msra.mxu0 0.0
      %858 = vmatprep.subr.mxu0 0.0
      %859 = vmatpush1.msra.mxu0 0.0
      %860 = vmatprep.subr.mxu0 0.0
      %861 = vmatpush1.msra.mxu0 0.0
      %862 = vmatprep.subr.mxu0 0.0
      %863 = vmatpush1.msra.mxu0 0.0
      %864 = vmatprep.subr.mxu0 0.0
      %865 = vmatpush1.msra.mxu0 0.0
      %866 = vmatprep.subr.mxu0 0.0
      %867 = vmatpush1.msra.mxu0 0.0
      %868 = vmatprep.subr.mxu0 0.0
      %869 = vmatpush1.msra.mxu0 0.0
      %870 = vmatprep.subr.mxu0 0.0
      %871 = vmatpush1.msra.mxu0 0.0
      %872 = vmatprep.subr.mxu0 0.0
      %873 = vmatpush1.msra.mxu0 0.0
      %874 = vmatprep.subr.mxu0 0.0
      %875 = vmatpush1.msra.mxu0 0.0
      %876 = vmatprep.subr.mxu0 0.0
      %877 = vmatpush1.msra.mxu0 0.0
      %878 = vmatprep.subr.mxu0 0.0
      %879 = vmatpush1.msra.mxu0 0.0
      %880 = vmatprep.subr.mxu0 0.0
      %881 = vmatpush1.msra.mxu0 0.0
      %882 = vmatprep.subr.mxu0 0.0
      %883 = vmatpush1.msra.mxu0 0.0
      %884 = vmatprep.subr.mxu0 0.0
      %885 = vmatpush1.msra.mxu0 0.0
      %886 = vmatprep.subr.mxu0 0.0
      %887 = vmatpush1.msra.mxu0 0.0
      %888 = vmatprep.subr.mxu0 0.0
      %889 = vmatpush1.msra.mxu0 0.0
      %890 = vmatprep.subr.mxu0 0.0
      %891 = vmatpush1.msra.mxu0 0.0
      %892 = vmatprep.subr.mxu0 0.0
      %893 = vmatpush1.msra.mxu0 0.0
      %894 = vmatprep.subr.mxu0 0.0
      %895 = vmatpush1.msra.mxu0 0.0
      %896 = vmatprep.mubr.f32.mxu0 0.0
      %897 = vmatmul.mubr.f32.gmra.mrb[0].mxu0 %v830
      %v898 = vpop.f32.mrb[0].mxu0
      %v899 = vadd.f32 0.0, %v898
      %v900 = vpop.f32.mrb[0].mxu0
      %901 = vdwg.mxu0
      %v902 = vadd.f32 %v829, %v899
      %v903 = vxor.u32 %v902, 2147483648
      %v904 = vmul.f32 %v903, 1.442695
      %v905 = vpow.pop %v904
      %v906 = vadd.f32 %v905, 1.0
      %v907 = vrcp.pop %v906
      %v908 = vmul.f32 1.0, %v907
      %v909 = vtanh.pop %v902
      %v910 = vmul.f32 %v908, %v815
      %912 = vrot.lane.b32.xlu0 %v909, 64
      %v913 = vpop.permute.xlu0 %912
      %v915 = vmul.f32 %v908, %v913
      %917 = vrot.lane.b32.xlu0 %v915, 32
      %v918 = vpop.permute.xlu0 %917
      %v920 = vadd.f32 %v910, %v918
      %v921 = vtanh.pop %v920
      %923 = vrot.lane.b32.xlu0 %v921, 64
      %v924 = vpop.permute.xlu0 %923
      %v926 = vmul.f32 %v908, %v924
      %928 = vrot.lane.b32.xlu0 %v926, 32
      %v929 = vpop.permute.xlu0 %928
      %s931 = scalar_lea.vmem %s406, 4
      %932 = vst.msk [vmem:[%s931] sm:$0x3] %vm721, %v929
      %s933 = scalar_lea.vmem [#allocation2], 6
      %v934 = vld [vmem:[%s933] sm:$0x3]
      %v935 = vsel %vm476, %v929, 0
      %937 = vmatprep.subr.mxu0 0.0
      %938 = vmatpush1.msra.mxu0 %v608
      %939 = vmatprep.subr.mxu0 0.0
      %940 = vmatpush1.msra.mxu0 %v609
      %941 = vmatprep.subr.mxu0 0.0
      %942 = vmatpush1.msra.mxu0 %v610
      %943 = vmatprep.subr.mxu0 0.0
      %944 = vmatpush1.msra.mxu0 %v611
      %945 = vmatprep.subr.mxu0 0.0
      %946 = vmatpush1.msra.mxu0 0.0
      %947 = vmatprep.subr.mxu0 0.0
      %948 = vmatpush1.msra.mxu0 0.0
      %949 = vmatprep.subr.mxu0 0.0
      %950 = vmatpush1.msra.mxu0 0.0
      %951 = vmatprep.subr.mxu0 0.0
      %952 = vmatpush1.msra.mxu0 0.0
      %953 = vmatprep.subr.mxu0 0.0
      %954 = vmatpush1.msra.mxu0 0.0
      %955 = vmatprep.subr.mxu0 0.0
      %956 = vmatpush1.msra.mxu0 0.0
      %957 = vmatprep.subr.mxu0 0.0
      %958 = vmatpush1.msra.mxu0 0.0
      %959 = vmatprep.subr.mxu0 0.0
      %960 = vmatpush1.msra.mxu0 0.0
      %961 = vmatprep.subr.mxu0 0.0
      %962 = vmatpush1.msra.mxu0 0.0
      %963 = vmatprep.subr.mxu0 0.0
      %964 = vmatpush1.msra.mxu0 0.0
      %965 = vmatprep.subr.mxu0 0.0
      %966 = vmatpush1.msra.mxu0 0.0
      %967 = vmatprep.subr.mxu0 0.0
      %968 = vmatpush1.msra.mxu0 0.0
      %969 = vmatprep.subr.mxu0 0.0
      %970 = vmatpush1.msra.mxu0 0.0
      %971 = vmatprep.subr.mxu0 0.0
      %972 = vmatpush1.msra.mxu0 0.0
      %973 = vmatprep.subr.mxu0 0.0
      %974 = vmatpush1.msra.mxu0 0.0
      %975 = vmatprep.subr.mxu0 0.0
      %976 = vmatpush1.msra.mxu0 0.0
      %977 = vmatprep.subr.mxu0 0.0
      %978 = vmatpush1.msra.mxu0 0.0
      %979 = vmatprep.subr.mxu0 0.0
      %980 = vmatpush1.msra.mxu0 0.0
      %981 = vmatprep.subr.mxu0 0.0
      %982 = vmatpush1.msra.mxu0 0.0
      %983 = vmatprep.subr.mxu0 0.0
      %984 = vmatpush1.msra.mxu0 0.0
      %985 = vmatprep.subr.mxu0 0.0
      %986 = vmatpush1.msra.mxu0 0.0
      %987 = vmatprep.subr.mxu0 0.0
      %988 = vmatpush1.msra.mxu0 0.0
      %989 = vmatprep.subr.mxu0 0.0
      %990 = vmatpush1.msra.mxu0 0.0
      %991 = vmatprep.subr.mxu0 0.0
      %992 = vmatpush1.msra.mxu0 0.0
      %993 = vmatprep.subr.mxu0 0.0
      %994 = vmatpush1.msra.mxu0 0.0
      %995 = vmatprep.subr.mxu0 0.0
      %996 = vmatpush1.msra.mxu0 0.0
      %997 = vmatprep.subr.mxu0 0.0
      %998 = vmatpush1.msra.mxu0 0.0
      %999 = vmatprep.subr.mxu0 0.0
      %1000 = vmatpush1.msra.mxu0 0.0
      %1001 = vmatprep.mubr.f32.mxu0 0.0
      %1002 = vmatmul.mubr.f32.gmra.mrb[0].mxu0 %v935
      %v1003 = vpop.f32.mrb[0].mxu0
      %v1004 = vadd.f32 0.0, %v1003
      %v1005 = vpop.f32.mrb[0].mxu0
      %1006 = vdwg.mxu0
      %v1007 = vadd.f32 %v934, %v1004
      %v1008 = vxor.u32 %v1007, 2147483648
      %v1009 = vmul.f32 %v1008, 1.442695
      %v1010 = vpow.pop %v1009
      %v1011 = vadd.f32 %v1010, 1.0
      %v1012 = vrcp.pop %v1011
      %v1013 = vmul.f32 1.0, %v1012
      %v1014 = vtanh.pop %v1007
      %v1015 = vmul.f32 %v1013, %v920
      %1017 = vrot.lane.b32.xlu0 %v1014, 64
      %v1018 = vpop.permute.xlu0 %1017
      %v1020 = vmul.f32 %v1013, %v1018
      %1022 = vrot.lane.b32.xlu0 %v1020, 32
      %v1023 = vpop.permute.xlu0 %1022
      %v1025 = vadd.f32 %v1015, %v1023
      %v1026 = vtanh.pop %v1025
      %1028 = vrot.lane.b32.xlu0 %v1026, 64
      %v1029 = vpop.permute.xlu0 %1028
      %v1031 = vmul.f32 %v1013, %v1029
      %1033 = vrot.lane.b32.xlu0 %v1031, 32
      %v1034 = vpop.permute.xlu0 %1033
      %s1036 = scalar_lea.vmem %s406, 6
      %1037 = vst.msk [vmem:[%s1036] sm:$0x3] %vm721, %v1034
      %s1038 = scalar_lea.vmem [#allocation2], 8
      %v1039 = vld [vmem:[%s1038] sm:$0x3]
      %v1040 = vsel %vm476, %v1034, 0
      %1042 = vmatprep.subr.mxu0 0.0
      %1043 = vmatpush1.msra.mxu0 %v608
      %1044 = vmatprep.subr.mxu0 0.0
      %1045 = vmatpush1.msra.mxu0 %v609
      %1046 = vmatprep.subr.mxu0 0.0
      %1047 = vmatpush1.msra.mxu0 %v610
      %1048 = vmatprep.subr.mxu0 0.0
      %1049 = vmatpush1.msra.mxu0 %v611
      %1050 = vmatprep.subr.mxu0 0.0
      %1051 = vmatpush1.msra.mxu0 0.0
      %1052 = vmatprep.subr.mxu0 0.0
      %1053 = vmatpush1.msra.mxu0 0.0
      %1054 = vmatprep.subr.mxu0 0.0
      %1055 = vmatpush1.msra.mxu0 0.0
      %1056 = vmatprep.subr.mxu0 0.0
      %1057 = vmatpush1.msra.mxu0 0.0
      %1058 = vmatprep.subr.mxu0 0.0
      %1059 = vmatpush1.msra.mxu0 0.0
      %1060 = vmatprep.subr.mxu0 0.0
      %1061 = vmatpush1.msra.mxu0 0.0
      %1062 = vmatprep.subr.mxu0 0.0
      %1063 = vmatpush1.msra.mxu0 0.0
      %1064 = vmatprep.subr.mxu0 0.0
      %1065 = vmatpush1.msra.mxu0 0.0
      %1066 = vmatprep.subr.mxu0 0.0
      %1067 = vmatpush1.msra.mxu0 0.0
      %1068 = vmatprep.subr.mxu0 0.0
      %1069 = vmatpush1.msra.mxu0 0.0
      %1070 = vmatprep.subr.mxu0 0.0
      %1071 = vmatpush1.msra.mxu0 0.0
      %1072 = vmatprep.subr.mxu0 0.0
      %1073 = vmatpush1.msra.mxu0 0.0
      %1074 = vmatprep.subr.mxu0 0.0
      %1075 = vmatpush1.msra.mxu0 0.0
      %1076 = vmatprep.subr.mxu0 0.0
      %1077 = vmatpush1.msra.mxu0 0.0
      %1078 = vmatprep.subr.mxu0 0.0
      %1079 = vmatpush1.msra.mxu0 0.0
      %1080 = vmatprep.subr.mxu0 0.0
      %1081 = vmatpush1.msra.mxu0 0.0
      %1082 = vmatprep.subr.mxu0 0.0
      %1083 = vmatpush1.msra.mxu0 0.0
      %1084 = vmatprep.subr.mxu0 0.0
      %1085 = vmatpush1.msra.mxu0 0.0
      %1086 = vmatprep.subr.mxu0 0.0
      %1087 = vmatpush1.msra.mxu0 0.0
      %1088 = vmatprep.subr.mxu0 0.0
      %1089 = vmatpush1.msra.mxu0 0.0
      %1090 = vmatprep.subr.mxu0 0.0
      %1091 = vmatpush1.msra.mxu0 0.0
      %1092 = vmatprep.subr.mxu0 0.0
      %1093 = vmatpush1.msra.mxu0 0.0
      %1094 = vmatprep.subr.mxu0 0.0
      %1095 = vmatpush1.msra.mxu0 0.0
      %1096 = vmatprep.subr.mxu0 0.0
      %1097 = vmatpush1.msra.mxu0 0.0
      %1098 = vmatprep.subr.mxu0 0.0
      %1099 = vmatpush1.msra.mxu0 0.0
      %1100 = vmatprep.subr.mxu0 0.0
      %1101 = vmatpush1.msra.mxu0 0.0
      %1102 = vmatprep.subr.mxu0 0.0
      %1103 = vmatpush1.msra.mxu0 0.0
      %1104 = vmatprep.subr.mxu0 0.0
      %1105 = vmatpush1.msra.mxu0 0.0
      %1106 = vmatprep.mubr.f32.mxu0 0.0
      %1107 = vmatmul.mubr.f32.gmra.mrb[0].mxu0 %v1040
      %v1108 = vpop.f32.mrb[0].mxu0
      %v1109 = vadd.f32 0.0, %v1108
      %v1110 = vpop.f32.mrb[0].mxu0
      %1111 = vdwg.mxu0
      %v1112 = vadd.f32 %v1039, %v1109
      %v1113 = vxor.u32 %v1112, 2147483648
      %v1114 = vmul.f32 %v1113, 1.442695
      %v1115 = vpow.pop %v1114
      %v1116 = vadd.f32 %v1115, 1.0
      %v1117 = vrcp.pop %v1116
      %v1118 = vmul.f32 1.0, %v1117
      %v1119 = vtanh.pop %v1112
      %v1120 = vmul.f32 %v1118, %v1025
      %1122 = vrot.lane.b32.xlu0 %v1119, 64
      %v1123 = vpop.permute.xlu0 %1122
      %v1125 = vmul.f32 %v1118, %v1123
      %1127 = vrot.lane.b32.xlu0 %v1125, 32
      %v1128 = vpop.permute.xlu0 %1127
      %v1130 = vadd.f32 %v1120, %v1128
      %v1131 = vtanh.pop %v1130
      %1133 = vrot.lane.b32.xlu0 %v1131, 64
      %v1134 = vpop.permute.xlu0 %1133
      %v1136 = vmul.f32 %v1118, %v1134
      %1138 = vrot.lane.b32.xlu0 %v1136, 32
      %v1139 = vpop.permute.xlu0 %1138
      %s1141 = scalar_lea.vmem %s406, 8
      %1142 = vst.msk [vmem:[%s1141] sm:$0x3] %vm721, %v1139
      %s1143 = scalar_lea.vmem [#allocation2], 10
      %v1144 = vld [vmem:[%s1143] sm:$0x3]
      %v1145 = vsel %vm476, %v1139, 0
      %1147 = vmatprep.subr.mxu0 0.0
      %1148 = vmatpush1.msra.mxu0 %v608
      %1149 = vmatprep.subr.mxu0 0.0
      %1150 = vmatpush1.msra.mxu0 %v609
      %1151 = vmatprep.subr.mxu0 0.0
      %1152 = vmatpush1.msra.mxu0 %v610
      %1153 = vmatprep.subr.mxu0 0.0
      %1154 = vmatpush1.msra.mxu0 %v611
      %1155 = vmatprep.subr.mxu0 0.0
      %1156 = vmatpush1.msra.mxu0 0.0
      %1157 = vmatprep.subr.mxu0 0.0
      %1158 = vmatpush1.msra.mxu0 0.0
      %1159 = vmatprep.subr.mxu0 0.0
      %1160 = vmatpush1.msra.mxu0 0.0
      %1161 = vmatprep.subr.mxu0 0.0
      %1162 = vmatpush1.msra.mxu0 0.0
      %1163 = vmatprep.subr.mxu0 0.0
      %1164 = vmatpush1.msra.mxu0 0.0
      %1165 = vmatprep.subr.mxu0 0.0
      %1166 = vmatpush1.msra.mxu0 0.0
      %1167 = vmatprep.subr.mxu0 0.0
      %1168 = vmatpush1.msra.mxu0 0.0
      %1169 = vmatprep.subr.mxu0 0.0
      %1170 = vmatpush1.msra.mxu0 0.0
      %1171 = vmatprep.subr.mxu0 0.0
      %1172 = vmatpush1.msra.mxu0 0.0
      %1173 = vmatprep.subr.mxu0 0.0
      %1174 = vmatpush1.msra.mxu0 0.0
      %1175 = vmatprep.subr.mxu0 0.0
      %1176 = vmatpush1.msra.mxu0 0.0
      %1177 = vmatprep.subr.mxu0 0.0
      %1178 = vmatpush1.msra.mxu0 0.0
      %1179 = vmatprep.subr.mxu0 0.0
      %1180 = vmatpush1.msra.mxu0 0.0
      %1181 = vmatprep.subr.mxu0 0.0
      %1182 = vmatpush1.msra.mxu0 0.0
      %1183 = vmatprep.subr.mxu0 0.0
      %1184 = vmatpush1.msra.mxu0 0.0
      %1185 = vmatprep.subr.mxu0 0.0
      %1186 = vmatpush1.msra.mxu0 0.0
      %1187 = vmatprep.subr.mxu0 0.0
      %1188 = vmatpush1.msra.mxu0 0.0
      %1189 = vmatprep.subr.mxu0 0.0
      %1190 = vmatpush1.msra.mxu0 0.0
      %1191 = vmatprep.subr.mxu0 0.0
      %1192 = vmatpush1.msra.mxu0 0.0
      %1193 = vmatprep.subr.mxu0 0.0
      %1194 = vmatpush1.msra.mxu0 0.0
      %1195 = vmatprep.subr.mxu0 0.0
      %1196 = vmatpush1.msra.mxu0 0.0
      %1197 = vmatprep.subr.mxu0 0.0
      %1198 = vmatpush1.msra.mxu0 0.0
      %1199 = vmatprep.subr.mxu0 0.0
      %1200 = vmatpush1.msra.mxu0 0.0
      %1201 = vmatprep.subr.mxu0 0.0
      %1202 = vmatpush1.msra.mxu0 0.0
      %1203 = vmatprep.subr.mxu0 0.0
      %1204 = vmatpush1.msra.mxu0 0.0
      %1205 = vmatprep.subr.mxu0 0.0
      %1206 = vmatpush1.msra.mxu0 0.0
      %1207 = vmatprep.subr.mxu0 0.0
      %1208 = vmatpush1.msra.mxu0 0.0
      %1209 = vmatprep.subr.mxu0 0.0
      %1210 = vmatpush1.msra.mxu0 0.0
      %1211 = vmatprep.mubr.f32.mxu0 0.0
      %1212 = vmatmul.mubr.f32.gmra.mrb[0].mxu0 %v1145
      %v1213 = vpop.f32.mrb[0].mxu0
      %v1214 = vadd.f32 0.0, %v1213
      %v1215 = vpop.f32.mrb[0].mxu0
      %1216 = vdwg.mxu0
      %v1217 = vadd.f32 %v1144, %v1214
      %v1218 = vxor.u32 %v1217, 2147483648
      %v1219 = vmul.f32 %v1218, 1.442695
      %v1220 = vpow.pop %v1219
      %v1221 = vadd.f32 %v1220, 1.0
      %v1222 = vrcp.pop %v1221
      %v1223 = vmul.f32 1.0, %v1222
      %v1224 = vtanh.pop %v1217
      %v1225 = vmul.f32 %v1223, %v1130
      %1227 = vrot.lane.b32.xlu0 %v1224, 64
      %v1228 = vpop.permute.xlu0 %1227
      %v1230 = vmul.f32 %v1223, %v1228
      %1232 = vrot.lane.b32.xlu0 %v1230, 32
      %v1233 = vpop.permute.xlu0 %1232
      %v1235 = vadd.f32 %v1225, %v1233
      %v1236 = vtanh.pop %v1235
      %1238 = vrot.lane.b32.xlu0 %v1236, 64
      %v1239 = vpop.permute.xlu0 %1238
      %v1241 = vmul.f32 %v1223, %v1239
      %1243 = vrot.lane.b32.xlu0 %v1241, 32
      %v1244 = vpop.permute.xlu0 %1243
      %s1246 = scalar_lea.vmem %s406, 10
      %1247 = vst.msk [vmem:[%s1246] sm:$0x3] %vm721, %v1244
      %s1248 = scalar_lea.vmem [#allocation2], 12
      %v1249 = vld [vmem:[%s1248] sm:$0x3]
      %v1250 = vsel %vm476, %v1244, 0
      %1252 = vmatprep.subr.mxu0 0.0
      %1253 = vmatpush1.msra.mxu0 %v608
      %1254 = vmatprep.subr.mxu0 0.0
      %1255 = vmatpush1.msra.mxu0 %v609
      %1256 = vmatprep.subr.mxu0 0.0
      %1257 = vmatpush1.msra.mxu0 %v610
      %1258 = vmatprep.subr.mxu0 0.0
      %1259 = vmatpush1.msra.mxu0 %v611
      %1260 = vmatprep.subr.mxu0 0.0
      %1261 = vmatpush1.msra.mxu0 0.0
      %1262 = vmatprep.subr.mxu0 0.0
      %1263 = vmatpush1.msra.mxu0 0.0
      %1264 = vmatprep.subr.mxu0 0.0
      %1265 = vmatpush1.msra.mxu0 0.0
      %1266 = vmatprep.subr.mxu0 0.0
      %1267 = vmatpush1.msra.mxu0 0.0
      %1268 = vmatprep.subr.mxu0 0.0
      %1269 = vmatpush1.msra.mxu0 0.0
      %1270 = vmatprep.subr.mxu0 0.0
      %1271 = vmatpush1.msra.mxu0 0.0
      %1272 = vmatprep.subr.mxu0 0.0
      %1273 = vmatpush1.msra.mxu0 0.0
      %1274 = vmatprep.subr.mxu0 0.0
      %1275 = vmatpush1.msra.mxu0 0.0
      %1276 = vmatprep.subr.mxu0 0.0
      %1277 = vmatpush1.msra.mxu0 0.0
      %1278 = vmatprep.subr.mxu0 0.0
      %1279 = vmatpush1.msra.mxu0 0.0
      %1280 = vmatprep.subr.mxu0 0.0
      %1281 = vmatpush1.msra.mxu0 0.0
      %1282 = vmatprep.subr.mxu0 0.0
      %1283 = vmatpush1.msra.mxu0 0.0
      %1284 = vmatprep.subr.mxu0 0.0
      %1285 = vmatpush1.msra.mxu0 0.0
      %1286 = vmatprep.subr.mxu0 0.0
      %1287 = vmatpush1.msra.mxu0 0.0
      %1288 = vmatprep.subr.mxu0 0.0
      %1289 = vmatpush1.msra.mxu0 0.0
      %1290 = vmatprep.subr.mxu0 0.0
      %1291 = vmatpush1.msra.mxu0 0.0
      %1292 = vmatprep.subr.mxu0 0.0
      %1293 = vmatpush1.msra.mxu0 0.0
      %1294 = vmatprep.subr.mxu0 0.0
      %1295 = vmatpush1.msra.mxu0 0.0
      %1296 = vmatprep.subr.mxu0 0.0
      %1297 = vmatpush1.msra.mxu0 0.0
      %1298 = vmatprep.subr.mxu0 0.0
      %1299 = vmatpush1.msra.mxu0 0.0
      %1300 = vmatprep.subr.mxu0 0.0
      %1301 = vmatpush1.msra.mxu0 0.0
      %1302 = vmatprep.subr.mxu0 0.0
      %1303 = vmatpush1.msra.mxu0 0.0
      %1304 = vmatprep.subr.mxu0 0.0
      %1305 = vmatpush1.msra.mxu0 0.0
      %1306 = vmatprep.subr.mxu0 0.0
      %1307 = vmatpush1.msra.mxu0 0.0
      %1308 = vmatprep.subr.mxu0 0.0
      %1309 = vmatpush1.msra.mxu0 0.0
      %1310 = vmatprep.subr.mxu0 0.0
      %1311 = vmatpush1.msra.mxu0 0.0
      %1312 = vmatprep.subr.mxu0 0.0
      %1313 = vmatpush1.msra.mxu0 0.0
      %1314 = vmatprep.subr.mxu0 0.0
      %1315 = vmatpush1.msra.mxu0 0.0
      %1316 = vmatprep.mubr.f32.mxu0 0.0
      %1317 = vmatmul.mubr.f32.gmra.mrb[0].mxu0 %v1250
      %v1318 = vpop.f32.mrb[0].mxu0
      %v1319 = vadd.f32 0.0, %v1318
      %v1320 = vpop.f32.mrb[0].mxu0
      %1321 = vdwg.mxu0
      %v1322 = vadd.f32 %v1249, %v1319
      %v1323 = vxor.u32 %v1322, 2147483648
      %v1324 = vmul.f32 %v1323, 1.442695
      %v1325 = vpow.pop %v1324
      %v1326 = vadd.f32 %v1325, 1.0
      %v1327 = vrcp.pop %v1326
      %v1328 = vmul.f32 1.0, %v1327
      %v1329 = vtanh.pop %v1322
      %v1330 = vmul.f32 %v1328, %v1235
      %1332 = vrot.lane.b32.xlu0 %v1329, 64
      %v1333 = vpop.permute.xlu0 %1332
      %v1335 = vmul.f32 %v1328, %v1333
      %1337 = vrot.lane.b32.xlu0 %v1335, 32
      %v1338 = vpop.permute.xlu0 %1337
      %v1340 = vadd.f32 %v1330, %v1338
      %v1341 = vtanh.pop %v1340
      %1343 = vrot.lane.b32.xlu0 %v1341, 64
      %v1344 = vpop.permute.xlu0 %1343
      %v1346 = vmul.f32 %v1328, %v1344
      %1348 = vrot.lane.b32.xlu0 %v1346, 32
      %v1349 = vpop.permute.xlu0 %1348
      %s1351 = scalar_lea.vmem %s406, 12
      %1352 = vst.msk [vmem:[%s1351] sm:$0x3] %vm721, %v1349
      %s1353 = scalar_lea.vmem [#allocation2], 14
      %v1354 = vld [vmem:[%s1353] sm:$0x3]
      %v1355 = vsel %vm476, %v1349, 0
      %1357 = vmatprep.subr.mxu0 0.0
      %1358 = vmatpush1.msra.mxu0 %v608
      %1359 = vmatprep.subr.mxu0 0.0
      %1360 = vmatpush1.msra.mxu0 %v609
      %1361 = vmatprep.subr.mxu0 0.0
      %1362 = vmatpush1.msra.mxu0 %v610
      %1363 = vmatprep.subr.mxu0 0.0
      %1364 = vmatpush1.msra.mxu0 %v611
      %1365 = vmatprep.subr.mxu0 0.0
      %1366 = vmatpush1.msra.mxu0 0.0
      %1367 = vmatprep.subr.mxu0 0.0
      %1368 = vmatpush1.msra.mxu0 0.0
      %1369 = vmatprep.subr.mxu0 0.0
      %1370 = vmatpush1.msra.mxu0 0.0
      %1371 = vmatprep.subr.mxu0 0.0
      %1372 = vmatpush1.msra.mxu0 0.0
      %1373 = vmatprep.subr.mxu0 0.0
      %1374 = vmatpush1.msra.mxu0 0.0
      %1375 = vmatprep.subr.mxu0 0.0
      %1376 = vmatpush1.msra.mxu0 0.0
      %1377 = vmatprep.subr.mxu0 0.0
      %1378 = vmatpush1.msra.mxu0 0.0
      %1379 = vmatprep.subr.mxu0 0.0
      %1380 = vmatpush1.msra.mxu0 0.0
      %1381 = vmatprep.subr.mxu0 0.0
      %1382 = vmatpush1.msra.mxu0 0.0
      %1383 = vmatprep.subr.mxu0 0.0
      %1384 = vmatpush1.msra.mxu0 0.0
      %1385 = vmatprep.subr.mxu0 0.0
      %1386 = vmatpush1.msra.mxu0 0.0
      %1387 = vmatprep.subr.mxu0 0.0
      %1388 = vmatpush1.msra.mxu0 0.0
      %1389 = vmatprep.subr.mxu0 0.0
      %1390 = vmatpush1.msra.mxu0 0.0
      %1391 = vmatprep.subr.mxu0 0.0
      %1392 = vmatpush1.msra.mxu0 0.0
      %1393 = vmatprep.subr.mxu0 0.0
      %1394 = vmatpush1.msra.mxu0 0.0
      %1395 = vmatprep.subr.mxu0 0.0
      %1396 = vmatpush1.msra.mxu0 0.0
      %1397 = vmatprep.subr.mxu0 0.0
      %1398 = vmatpush1.msra.mxu0 0.0
      %1399 = vmatprep.subr.mxu0 0.0
      %1400 = vmatpush1.msra.mxu0 0.0
      %1401 = vmatprep.subr.mxu0 0.0
      %1402 = vmatpush1.msra.mxu0 0.0
      %1403 = vmatprep.subr.mxu0 0.0
      %1404 = vmatpush1.msra.mxu0 0.0
      %1405 = vmatprep.subr.mxu0 0.0
      %1406 = vmatpush1.msra.mxu0 0.0
      %1407 = vmatprep.subr.mxu0 0.0
      %1408 = vmatpush1.msra.mxu0 0.0
      %1409 = vmatprep.subr.mxu0 0.0
      %1410 = vmatpush1.msra.mxu0 0.0
      %1411 = vmatprep.subr.mxu0 0.0
      %1412 = vmatpush1.msra.mxu0 0.0
      %1413 = vmatprep.subr.mxu0 0.0
      %1414 = vmatpush1.msra.mxu0 0.0
      %1415 = vmatprep.subr.mxu0 0.0
      %1416 = vmatpush1.msra.mxu0 0.0
      %1417 = vmatprep.subr.mxu0 0.0
      %1418 = vmatpush1.msra.mxu0 0.0
      %1419 = vmatprep.subr.mxu0 0.0
      %1420 = vmatpush1.msra.mxu0 0.0
      %1421 = vmatprep.mubr.f32.mxu0 0.0
      %1422 = vmatmul.mubr.f32.gmra.mrb[0].mxu0 %v1355
      %v1423 = vpop.f32.mrb[0].mxu0
      %v1424 = vadd.f32 0.0, %v1423
      %v1425 = vpop.f32.mrb[0].mxu0
      %1426 = vdwg.mxu0
      %v1427 = vadd.f32 %v1354, %v1424
      %v1428 = vxor.u32 %v1427, 2147483648
      %v1429 = vmul.f32 %v1428, 1.442695
      %v1430 = vpow.pop %v1429
      %v1431 = vadd.f32 %v1430, 1.0
      %v1432 = vrcp.pop %v1431
      %v1433 = vmul.f32 1.0, %v1432
      %v1434 = vtanh.pop %v1427
      %v1435 = vmul.f32 %v1433, %v1340
      %1437 = vrot.lane.b32.xlu0 %v1434, 64
      %v1438 = vpop.permute.xlu0 %1437
      %v1440 = vmul.f32 %v1433, %v1438
      %1442 = vrot.lane.b32.xlu0 %v1440, 32
      %v1443 = vpop.permute.xlu0 %1442
      %v1445 = vadd.f32 %v1435, %v1443
      %v1446 = vtanh.pop %v1445
      %1448 = vrot.lane.b32.xlu0 %v1446, 64
      %v1449 = vpop.permute.xlu0 %1448
      %v1451 = vmul.f32 %v1433, %v1449
      %1453 = vrot.lane.b32.xlu0 %v1451, 32
      %v1454 = vpop.permute.xlu0 %1453
      %s1456 = scalar_lea.vmem %s406, 14
      %1457 = vst.msk [vmem:[%s1456] sm:$0x3] %vm721, %v1454
      %1458 = vst.msk [vmem:[%s410] sm:$0x3] %vm721, %v1454
      %1460 = vrot.lane.b32.xlu0 %v1445, 96
      %v1461 = vpop.permute.xlu0 %1460
      %1463 = vst.msk [vmem:[%s414] sm:$0x3] %vm721, %v1461
      %p1464 = scmp.lt.s32.totalorder %s20, 1
      %s1465 = scalar_select %p1464, %s20, 1
      %s1466 = smul.addr %s1465, 8
      %s1467 = smul.addr %s1466, 2
      %s1468 = scalar_lea.vmem %s6, %s1467
      %p1469 = scmp.lt.s32.totalorder %s20, 1
      %s1470 = scalar_select %p1469, %s20, 1
      %s1471 = smul.addr %s1470, 2
      %s1472 = scalar_lea.vmem %s7, %s1471
      %p1473 = scmp.lt.s32.totalorder %s20, 1
      %s1474 = scalar_select %p1473, %s20, 1
      %s1475 = smul.addr %s1474, 2
      %s1476 = scalar_lea.vmem %s8, %s1475
      // Predicated region
      $region45: #{bi_lstm_forward.3} parent=43 // pred_check
        %p1477 = pneg %p194
      $region46: #{bi_lstm_forward.3} parent=43 // pred_check_branch
        %1479 = sbr.rel (%p1477) target = $region48
      $region47: #{bi_lstm_forward.3} parent=43 // pred_region
        _
      $region48: #{bi_lstm_forward.3} parent=43 // pred_fallthru
        _
      // Predicated region
      $region49: #{bi_lstm_forward.3} parent=43 // pred_check
        %p1480 = pneg %p220
      $region50: #{bi_lstm_forward.3} parent=43 // pred_check_branch
        %1482 = sbr.rel (%p1480) target = $region52
      $region51: #{bi_lstm_forward.3} parent=43 // pred_region
        _
      $region52: #{bi_lstm_forward.3} parent=43 // pred_fallthru
        _
      // Predicated region
      $region53: #{bi_lstm_forward.3} parent=43 // pred_check
        %p1483 = pneg %p246
      $region54: #{bi_lstm_forward.3} parent=43 // pred_check_branch
        %1485 = sbr.rel (%p1483) target = $region56
      $region55: #{bi_lstm_forward.3} parent=43 // pred_region
        _
      $region56: #{bi_lstm_forward.3} parent=43 // pred_fallthru
        _
    $region44: #{bi_lstm_forward.3} parent=5 // pred_fallthru
      _
    %p1486 = scmp.le.s32.totalorder 2, %s15
    // Predicated region
    $region57: #{bi_lstm_forward.3} parent=5 // pred_check
      %p1487 = pneg %p1486
    $region58: #{bi_lstm_forward.3} parent=5 // pred_check_branch
      %1489 = sbr.rel (%p1487) target = $region60
    $region59: #{bi_lstm_forward.3} parent=5 // pred_region
      %s1490 = ssub.s32 %s15, 2
      // Predicated region
      $region61: #{bi_lstm_forward.3} parent=59 // pred_check
        %p1491 = pneg %p200
      $region62: #{bi_lstm_forward.3} parent=59 // pred_check_branch
        %1493 = sbr.rel (%p1491) target = $region64
      $region63: #{bi_lstm_forward.3} parent=59 // pred_region
        %p1494 = scmp.lt.s32.totalorder %s21, 1
        %s1495 = scalar_select %p1494, %s21, 1
        %s1496 = smul.addr %s1495, 8
        %s1497 = smul.addr %s1496, 2
        %s1498 = scalar_lea.vmem %s6, %s1497
      $region64: #{bi_lstm_forward.3} parent=59 // pred_fallthru
        _
      // Predicated region
      $region65: #{bi_lstm_forward.3} parent=59 // pred_check
        %p1499 = pneg %p226
      $region66: #{bi_lstm_forward.3} parent=59 // pred_check_branch
        %1501 = sbr.rel (%p1499) target = $region68
      $region67: #{bi_lstm_forward.3} parent=59 // pred_region
        %p1502 = scmp.lt.s32.totalorder %s21, 1
        %s1503 = scalar_select %p1502, %s21, 1
        %s1504 = smul.addr %s1503, 2
        %s1505 = scalar_lea.vmem %s7, %s1504
      $region68: #{bi_lstm_forward.3} parent=59 // pred_fallthru
        _
      // Predicated region
      $region69: #{bi_lstm_forward.3} parent=59 // pred_check
        %p1506 = pneg %p252
      $region70: #{bi_lstm_forward.3} parent=59 // pred_check_branch
        %1508 = sbr.rel (%p1506) target = $region72
      $region71: #{bi_lstm_forward.3} parent=59 // pred_region
        %p1509 = scmp.lt.s32.totalorder %s21, 1
        %s1510 = scalar_select %p1509, %s21, 1
        %s1511 = smul.addr %s1510, 2
        %s1512 = scalar_lea.vmem %s8, %s1511
      $region72: #{bi_lstm_forward.3} parent=59 // pred_fallthru
        _
    $region60: #{bi_lstm_forward.3} parent=5 // pred_fallthru
      _
  $region6: #{bi_lstm_forward.3} parent=0 // loop_footer
    %s19 = sadd.s32 1, %s15
  $region7: #{bi_lstm_forward.3} parent=0 // loop_footer_branch
    %14 = sbr.rel target = $region3
  $region8: #{bi_lstm_forward.3} parent=0 // loop_exit
    _

</llo_original>
